<compile_context>
chip_gen: v5e
topology: v5e:2x2
jax: 0.10.0
libtpu: 0.0.40
codegen_flags: <defaults>
</compile_context>

<pallas_src>
import math
from functools import partial

import jax
import jax.numpy as jnp
from jax.experimental import pallas as pl
from jax.experimental.pallas import tpu as pltpu

LANE = 128
ACT_DTYPE = jnp.bfloat16            # activations / GEMM operands (f32 accumulate)
_VMEM_LIMIT = 32 * 1024 * 1024      # explicit scoped-VMEM budget; safe on v5e/v6e/v7x
BN_EPS = 1e-5


def _round_up(x, m):
    return (x + m - 1) // m * m


def _pick_tiles(M, K, Cout):
    """Resolution-independent GEMM tiling.

    TN: 256/512 matches the 256x256 MXU of v6e/v7x and reduces the number of
        full passes over the (large) im2col A matrix for wide layers.
    TK: prefer 256-512 (fewer grid steps), allowing <= ~12.5% zero padding.
    TM: 512-row M tiles keep VMEM use independent of image resolution and
        give many "parallel" M tiles for v7x megacore sharding.
    """
    if Cout >= 1024:
        TN = 512
    elif Cout >= 256:
        TN = 256
    else:
        TN = LANE
    Np = _round_up(Cout, TN)

    kp_min = _round_up(K, LANE)
    TK = LANE
    for tk in (512, 256):
        if _round_up(K, tk) <= kp_min * 9 // 8:
            TK = tk
            break
    Kp = _round_up(K, TK)

    if M > 1024:
        TM = 512
    else:
        TM = _round_up(M, 16)
    Mp = _round_up(M, TM)
    return TM, Mp, TK, Kp, TN, Np


# ----------------------------------------------------------------------------
# Fused conv-as-GEMM kernel.
#   bn=False: Y = relu?( A@W + bias + residual )
#   bn=True : Z = A@W (no bias); also emit per-tile (sum, sumsq) channel stats.
# ----------------------------------------------------------------------------
def _gemm_kernel(*refs, bn, relu, has_res, has_bias):
    a_ref, w_ref = refs[0], refs[1]
    pos = 2
    b_ref = refs[pos] if has_bias else None
    pos += int(has_bias)
    r_ref = refs[pos] if has_res else None
    pos += int(has_res)
    o_ref = refs[pos]
    pos += 1
    st_ref = refs[pos] if bn else None
    acc_ref = refs[-1]

    k = pl.program_id(2)

    @pl.when(k == 0)
    def _():
        if has_bias:
            acc_ref[...] = jnp.broadcast_to(b_ref[...], acc_ref.shape)
        else:
            acc_ref[...] = jnp.zeros_like(acc_ref)

    acc_ref[...] += jnp.dot(a_ref[...], w_ref[...],
                            preferred_element_type=jnp.float32)

    @pl.when(k == pl.num_programs(2) - 1)
    def _():
        y = acc_ref[...]
        if bn:
            # Partial batch statistics for this (M-tile, channel-tile).
            # Padded rows are all-zero (no bias) and contribute nothing.
            s1 = jnp.sum(y, axis=0, keepdims=True)
            s2 = jnp.sum(y * y, axis=0, keepdims=True)
            st_ref[...] = jnp.concatenate([s1, s2], axis=0)[None]
            o_ref[...] = y.astype(o_ref.dtype)
        else:
            if has_res:
                y = y + r_ref[...].astype(jnp.float32)
            if relu:
                y = jnp.maximum(y, 0.0)
            o_ref[...] = y.astype(o_ref.dtype)


# ----------------------------------------------------------------------------
# BatchNorm apply kernel: Y = relu?( Z*scale + shift [+ residual] )
# (residual added before or after ReLU depending on the fusion site)
# ----------------------------------------------------------------------------
def _bn_apply_kernel(*refs, relu, has_res, res_after_relu):
    if has_res:
        z_ref, s_ref, t_ref, r_ref, o_ref = refs
    else:
        z_ref, s_ref, t_ref, o_ref = refs
        r_ref = None
    y = z_ref[...].astype(jnp.float32) * s_ref[...] + t_ref[...]
    if has_res and not res_after_relu:
        y = y + r_ref[...].astype(jnp.float32)
    if relu:
        y = jnp.maximum(y, 0.0)
    if has_res and res_after_relu:
        y = y + r_ref[...].astype(jnp.float32)
    o_ref[...] = y.astype(o_ref.dtype)


def _bn_apply(Z, scale, shift, residual, *, relu, res_after_relu, TM, TN):
    Mp, Np = Z.shape
    has_res = residual is not None
    inputs = [Z, scale, shift]
    in_specs = [pl.BlockSpec((TM, TN), lambda m, n: (m, n)),
                pl.BlockSpec((1, TN), lambda m, n: (0, n)),
                pl.BlockSpec((1, TN), lambda m, n: (0, n))]
    if has_res:
        inputs.append(residual)
        in_specs.append(pl.BlockSpec((TM, TN), lambda m, n: (m, n)))
    return pl.pallas_call(
        partial(_bn_apply_kernel, relu=relu, has_res=has_res,
                res_after_relu=res_after_relu),
        out_shape=jax.ShapeDtypeStruct((Mp, Np), ACT_DTYPE),
        grid_spec=pltpu.PrefetchScalarGridSpec(
            num_scalar_prefetch=0,
            grid=(Mp // TM, Np // TN),
            in_specs=in_specs,
            out_specs=pl.BlockSpec((TM, TN), lambda m, n: (m, n)),
        ),
        compiler_params=pltpu.CompilerParams(
            dimension_semantics=("parallel", "parallel"),
            vmem_limit_bytes=_VMEM_LIMIT),
    )(*inputs)


# ----------------------------------------------------------------------------
# conv2d: Conv2d [+ BatchNorm2d (batch stats)] [+ residual] [+ ReLU]
# ----------------------------------------------------------------------------
def conv2d(x, w, b=None, *, stride=(1, 1), padding=(1, 1), bn=False, relu=False,
           residual=None, residual_after_relu=False):
    """x: (N,H,W,Cin).  w: (Cout,Cin,kh,kw) PyTorch layout (f32).  b: (Cout,).

    bn=True applies training-mode BatchNorm2d (gamma=1, beta=0); the conv bias
    is dropped there since a per-channel constant is exactly cancelled by the
    batch-statistics normalisation.  `residual` (NHWC, output shape) is added
    before ReLU (bottleneck) or after ReLU (decoder shortcut fusion)."""
    N, H, W_, Cin = x.shape
    Cout, _, kh, kw = w.shape
    sh, sw = stride
    ph, pw = padding
    Ho = (H + 2 * ph - kh) // sh + 1
    Wo = (W_ + 2 * pw - kw) // sw + 1
    M = N * Ho * Wo

    # ---- GEMM LHS (M, K) in bf16: 1x1 convs need no im2col at all ----------
    if kh == 1 and kw == 1 and ph == 0 and pw == 0:
        xs = x if (sh == 1 and sw == 1) else x[:, ::sh, ::sw, :]
        K = Cin
        A = xs.reshape(M, K)
    else:
        # TODO(synk): replace this explicit im2col (kh*kw-fold HBM inflation of
        # the input) with an implicit GEMM that manually DMAs shifted windows
        # of the padded NHWC input (tap axis folded into the K loop).
        xp = jnp.pad(x, ((0, 0), (ph, ph), (pw, pw), (0, 0)))
        cols = []
        for i in range(kh):
            for j in range(kw):
                cols.append(xp[:, i:i + sh * Ho:sh, j:j + sw * Wo:sw, :])
        K = kh * kw * Cin
        A = jnp.concatenate(cols, axis=-1).reshape(M, K)
    A = A.astype(ACT_DTYPE)
    Wm = jnp.transpose(w, (2, 3, 1, 0)).reshape(K, Cout).astype(ACT_DTYPE)

    TM, Mp, TK, Kp, TN, Np = _pick_tiles(M, K, Cout)
    A = jnp.pad(A, ((0, Mp - M), (0, Kp - K)))
    Wm = jnp.pad(Wm, ((0, Kp - K), (0, Np - Cout)))

    res2 = None
    if residual is not None:
        res2 = jnp.pad(residual.reshape(M, Cout).astype(ACT_DTYPE),
                       ((0, Mp - M), (0, Np - Cout)))

    has_bias = (b is not None) and (not bn)
    fuse_res = (residual is not None) and (not bn)

    inputs = [A, Wm]
    in_specs = [pl.BlockSpec((TM, TK), lambda m, n, k: (m, k)),
                pl.BlockSpec((TK, TN), lambda m, n, k: (k, n))]
    if has_bias:
        bias = jnp.pad(b.astype(jnp.float32), (0, Np - Cout)).reshape(1, Np)
        inputs.append(bias)
        in_specs.append(pl.BlockSpec((1, TN), lambda m, n, k: (0, n)))
    if fuse_res:
        inputs.append(res2)
        in_specs.append(pl.BlockSpec((TM, TN), lambda m, n, k: (m, n)))

    out_shapes = [jax.ShapeDtypeStruct((Mp, Np), ACT_DTYPE)]
    out_specs = [pl.BlockSpec((TM, TN), lambda m, n, k: (m, n))]
    if bn:
        out_shapes.append(jax.ShapeDtypeStruct((Mp // TM, 2, Np), jnp.float32))
        out_specs.append(pl.BlockSpec((1, 2, TN), lambda m, n, k: (m, 0, n)))

    outs = pl.pallas_call(
        partial(_gemm_kernel, bn=bn, relu=relu, has_res=fuse_res,
                has_bias=has_bias),
        out_shape=tuple(out_shapes),
        grid_spec=pltpu.PrefetchScalarGridSpec(
            num_scalar_prefetch=0,
            grid=(Mp // TM, Np // TN, Kp // TK),
            in_specs=in_specs,
            out_specs=tuple(out_specs),
            scratch_shapes=[pltpu.VMEM((TM, TN), jnp.float32)],
        ),
        compiler_params=pltpu.CompilerParams(
            dimension_semantics=("parallel", "parallel", "arbitrary"),
            vmem_limit_bytes=_VMEM_LIMIT),
    )(*inputs)

    if bn:
        Z, stats = outs
        s = jnp.sum(stats[:, 0, :], axis=0)          # (Np,) ; padded rows add 0
        ss = jnp.sum(stats[:, 1, :], axis=0)
        mean = s / M
        var = jnp.maximum(ss / M - mean * mean, 0.0)
        scale = jax.lax.rsqrt(var + BN_EPS)           # gamma = 1
        shift = -mean * scale                         # beta  = 0
        Y = _bn_apply(Z, scale.reshape(1, Np), shift.reshape(1, Np), res2,
                      relu=relu, res_after_relu=residual_after_relu,
                      TM=TM, TN=TN)
    else:
        Y = outs[0]
    return Y[:M, :Cout].reshape(N, Ho, Wo, Cout)


# ----------------------------------------------------------------------------
# MaxPool2d(kernel_size=3, stride=2, padding=1): tiled lane-dense max-reduce
# ----------------------------------------------------------------------------
def _maxpool_kernel(x_ref, o_ref):
    o_ref[...] = jnp.max(x_ref[...], axis=0)


def maxpool2d_3x3_s2_p1(x):
    N, H, W_, C = x.shape
    neg = float("-inf")
    xp = jnp.pad(x, ((0, 0), (1, 1), (1, 1), (0, 0)), constant_values=neg)
    Ho = (H + 2 - 3) // 2 + 1
    Wo = (W_ + 2 - 3) // 2 + 1
    taps = [xp[:, i:i + 2 * Ho:2, j:j + 2 * Wo:2, :]
            for i in range(3) for j in range(3)]
    X = jnp.stack(taps, axis=0)                      # (9, N, Ho, Wo, C)
    total = N * Ho * Wo * C
    lane = LANE if total % LANE == 0 else C          # lane-dense when possible
    R = total // lane
    X = X.reshape(9, R, lane)
    TR = min(1024, _round_up(R, 16))
    Rp = _round_up(R, TR)
    if Rp != R:
        X = jnp.pad(X, ((0, 0), (0, Rp - R), (0, 0)), constant_values=neg)
    out = pl.pallas_call(
        _maxpool_kernel,
        out_shape=jax.ShapeDtypeStruct((Rp, lane), x.dtype),
        grid_spec=pltpu.PrefetchScalarGridSpec(
            num_scalar_prefetch=0,
            grid=(Rp // TR,),
            in_specs=[pl.BlockSpec((9, TR, lane), lambda r: (0, r, 0))],
            out_specs=pl.BlockSpec((TR, lane), lambda r: (r, 0)),
        ),
        compiler_params=pltpu.CompilerParams(
            dimension_semantics=("parallel",),
            vmem_limit_bytes=_VMEM_LIMIT),
    )(X)
    return out[:R].reshape(N, Ho, Wo, C)


# ----------------------------------------------------------------------------
# PixelShuffle / inverse (pure layout glue, PyTorch channel ordering)
# ----------------------------------------------------------------------------
def pixel_shuffle(x, r=2):
    N, H, W_, Crr = x.shape
    C = Crr // (r * r)
    x = x.reshape(N, H, W_, C, r, r)
    x = jnp.transpose(x, (0, 1, 4, 2, 5, 3))
    return x.reshape(N, H * r, W_ * r, C)


def pixel_unshuffle(x, r=2):
    N, Hr, Wr, C = x.shape
    H, W_ = Hr // r, Wr // r
    x = x.reshape(N, H, r, W_, r, C)
    x = jnp.transpose(x, (0, 1, 3, 5, 2, 4))
    return x.reshape(N, H, W_, C * r * r)


# ----------------------------------------------------------------------------
# Parameter init (deterministic, synthetic — no checkpoints)
# ----------------------------------------------------------------------------
def _init_conv(key, cin, cout, kh, kw, bias):
    kw_, kb_ = jax.random.split(key)
    n = kh * kw * cout
    w = jax.random.normal(kw_, (cout, cin, kh, kw), jnp.float32) * math.sqrt(2.0 / n)
    b = (jax.random.normal(kb_, (cout,), jnp.float32) * 0.01) if bias else None
    return {"w": w, "b": b}


def _init_bottleneck(nk, inplanes, planes, stride, downsample):
    p = {
        "conv1": _init_conv(nk(), inplanes, planes, 1, 1, False),
        "conv2": _init_conv(nk(), planes, planes, 3, 3, False),
        "conv3": _init_conv(nk(), planes, planes * 4, 1, 1, False),
        "stride": stride,
    }
    if downsample:
        p["downsample"] = _init_conv(nk(), inplanes, planes * 4, 1, 1, False)
    return p


def _init_resblock(nk, inplanes, planes, blocks, stride):
    layers = [_init_bottleneck(nk, inplanes, planes, stride,
                               stride != 1 or inplanes != planes * 4)]
    inplanes = planes * 4
    for _ in range(1, blocks):
        layers.append(_init_bottleneck(nk, inplanes, planes, 1, False))
    return layers, inplanes


def _init_gcn(nk, cin, cout, k=7):
    return {
        "l1": _init_conv(nk(), cin, cout, k, 1, True),
        "l2": _init_conv(nk(), cout, cout, 1, k, True),
        "r1": _init_conv(nk(), cin, cout, 1, k, True),
        "r2": _init_conv(nk(), cout, cout, k, 1, True),
        "k": k,
    }


def init_adamatting_params(seed, in_channel=4):
    state = [jax.random.PRNGKey(seed)]

    def nk():
        state[0], sub = jax.random.split(state[0])
        return sub

    P = {}
    P["encoder_conv"] = _init_conv(nk(), in_channel, 64, 3, 3, True)
    inplanes = 64
    P["resblock1"], inplanes = _init_resblock(nk, inplanes, 64, 3, 2)
    P["resblock2"], inplanes = _init_resblock(nk, inplanes, 128, 4, 2)
    P["resblock3"], inplanes = _init_resblock(nk, inplanes, 256, 6, 2)
    P["shortcut_shallow"] = _init_gcn(nk, 64, 64)
    P["shortcut_middle"] = _init_gcn(nk, 256, 256)
    P["shortcut_deep"] = _init_gcn(nk, 512, 512)
    P["t_dec1"] = _init_conv(nk(), 1024, 2048, 3, 3, True)
    P["t_dec2"] = _init_conv(nk(), 512, 1024, 3, 3, True)
    P["t_dec3"] = _init_conv(nk(), 256, 256, 3, 3, True)
    P["t_dec4"] = _init_conv(nk(), 64, 12, 3, 3, True)
    P["a_dec1"] = _init_conv(nk(), 1024, 2048, 3, 3, True)
    P["a_dec2"] = _init_conv(nk(), 512, 1024, 3, 3, True)
    P["a_dec3"] = _init_conv(nk(), 256, 256, 3, 3, True)
    P["a_dec4"] = _init_conv(nk(), 64, 4, 3, 3, True)
    P["prop_unit"] = {
        "c1": _init_conv(nk(), 4 + 3 + 1, 64, 3, 3, True),
        "c2": _init_conv(nk(), 64, 64, 3, 3, True),
        "c3": _init_conv(nk(), 64, 1, 1, 1, True),
    }
    P["log_sigma_t_sqr"] = jnp.log(jnp.array([16.0], jnp.float32))
    P["log_sigma_a_sqr"] = jnp.log(jnp.array([16.0], jnp.float32))
    return P


# ----------------------------------------------------------------------------
# Forward pass
# ----------------------------------------------------------------------------
def bottleneck_forward(x, p):
    s = p["stride"]
    identity = x
    if "downsample" in p:
        identity = conv2d(x, p["downsample"]["w"], None, stride=(s, s),
                          padding=(0, 0), bn=True, relu=False)
    out = conv2d(x, p["conv1"]["w"], None, stride=(1, 1), padding=(0, 0),
                 bn=True, relu=True)
    out = conv2d(out, p["conv2"]["w"], None, stride=(s, s), padding=(1, 1),
                 bn=True, relu=True)
    out = conv2d(out, p["conv3"]["w"], None, stride=(1, 1), padding=(0, 0),
                 bn=True, relu=True, residual=identity,
                 residual_after_relu=False)
    return out


def resblock_forward(x, layers):
    for p in layers:
        x = bottleneck_forward(x, p)
    return x


def gcn_forward(x, p):
    k = p["k"]
    xl = conv2d(x, p["l1"]["w"], p["l1"]["b"], padding=(k // 2, 0))
    xl = conv2d(xl, p["l2"]["w"], p["l2"]["b"], padding=(0, k // 2))
    xr = conv2d(x, p["r1"]["w"], p["r1"]["b"], padding=(0, k // 2))
    xr = conv2d(xr, p["r2"]["w"], p["r2"]["b"], padding=(k // 2, 0),
                residual=xl)
    return xr


def upscale_forward(x, p, shortcut=None):
    # PixelShuffle(y) + s == PixelShuffle(y + unshuffle(s)): the decoder
    # shortcut add is fused into the BN-apply epilogue (after ReLU).
    res = pixel_unshuffle(shortcut, 2) if shortcut is not None else None
    y = conv2d(x, p["w"], p["b"], padding=(1, 1), bn=True, relu=True,
               residual=res, residual_after_relu=True)
    return pixel_shuffle(y, 2)


def adamatting_forward(params, x_nchw):
    raw = jnp.transpose(x_nchw, (0, 2, 3, 1)).astype(jnp.float32)   # -> NHWC
    x = raw.astype(ACT_DTYPE)

    x = conv2d(x, params["encoder_conv"]["w"], params["encoder_conv"]["b"],
               padding=(1, 1), bn=True, relu=True)
    encoder_shallow = maxpool2d_3x3_s2_p1(x)
    encoder_middle = resblock_forward(encoder_shallow, params["resblock1"])
    encoder_deep = resblock_forward(encoder_middle, params["resblock2"])
    encoder_result = resblock_forward(encoder_deep, params["resblock3"])

    shortcut_deep = gcn_forward(encoder_deep, params["shortcut_deep"])
    shortcut_middle = gcn_forward(encoder_middle, params["shortcut_middle"])
    shortcut_shallow = gcn_forward(encoder_shallow, params["shortcut_shallow"])

    t = upscale_forward(encoder_result, params["t_dec1"], shortcut=shortcut_deep)
    t = upscale_forward(t, params["t_dec2"], shortcut=shortcut_middle)
    t = upscale_forward(t, params["t_dec3"])
    t_decoder = upscale_forward(t, params["t_dec4"])            # (N,H,W,3)
    # torch.argmax(dim=1) == channel argmax; int32 here vs torch's int64.
    t_argmax = jnp.argmax(t_decoder, axis=-1)

    a = upscale_forward(encoder_result, params["a_dec1"])
    a = upscale_forward(a, params["a_dec2"], shortcut=shortcut_middle)
    a = upscale_forward(a, params["a_dec3"], shortcut=shortcut_shallow)
    a_decoder = upscale_forward(a, params["a_dec4"])            # (N,H,W,1)

    alpha = jnp.concatenate([raw.astype(ACT_DTYPE), t_decoder, a_decoder],
                            axis=-1)
    pu = params["prop_unit"]
    alpha = conv2d(alpha, pu["c1"]["w"], pu["c1"]["b"], padding=(1, 1),
                   bn=True, relu=True)
    alpha = conv2d(alpha, pu["c2"]["w"], pu["c2"]["b"], padding=(1, 1),
                   bn=True, relu=True)
    alpha = conv2d(alpha, pu["c3"]["w"], pu["c3"]["b"], padding=(0, 0))

    t_decoder_nchw = jnp.transpose(t_decoder.astype(jnp.float32), (0, 3, 1, 2))
    alpha_nchw = jnp.transpose(alpha.astype(jnp.float32), (0, 3, 1, 2))
    return (t_decoder_nchw, t_argmax, alpha_nchw,
            params["log_sigma_t_sqr"], params["log_sigma_a_sqr"])


if __name__ == "__main__":
    in_channel = 4                       # prop_unit concat is 4 + 3 + 1
    B, H, W = 2, 32, 32                  # 32 survives the 5 stride-2 stages
    key = jax.random.PRNGKey(0)
    x = jax.random.normal(key, (B, in_channel, H, W), jnp.float32)  # NCHW

    params = init_adamatting_params(seed=0, in_channel=in_channel)
    outs = adamatting_forward(params, x)
    for o in outs:
        jax.block_until_ready(o)

    t_dec, t_argmax, alpha, lt, la = outs
    assert t_dec.shape == (B, 3, H, W)
    assert t_argmax.shape == (B, H, W)
    assert alpha.shape == (B, 1, H, W)
    assert lt.shape == (1,) and la.shape == (1,)
    print("KERNEL_OK")
</pallas_src>

<mosaic_0001>
module attributes {stable_mosaic.version = 11 : i64} {
  func.func @_gemm_kernel(%arg0: i32, %arg1: i32, %arg2: i32, %arg3: memref<512x128xbf16, #tpu.memory_space<vmem>>, %arg4: memref<128x128xbf16, #tpu.memory_space<vmem>>, %arg5: memref<512x128xbf16, #tpu.memory_space<vmem>>, %arg6: memref<1x2x128xf32, #tpu.memory_space<vmem>>, %arg7: memref<512x128xf32, #tpu.memory_space<vmem>>) attributes {dimension_semantics = [#tpu.dimension_semantics<parallel>, #tpu.dimension_semantics<parallel>, #tpu.dimension_semantics<arbitrary>], iteration_bounds = array<i64: 4, 1, 1>, scalar_prefetch = 0 : i64, scratch_operands = 1 : i64, tpu.core_type = #tpu.core_type<tc>, window_params = [{transform_indices = @transform_0, window_bounds = array<i64: 512, 128>}, {transform_indices = @transform_1, window_bounds = array<i64: 128, 128>}, {transform_indices = @transform_2, window_bounds = array<i64: 512, 128>}, {transform_indices = @transform_3, window_bounds = array<i64: 1, 2, 128>}]} {
    %c0_i32 = arith.constant 0 : i32
    %0 = arith.cmpi eq, %arg2, %c0_i32 : i32
    %1 = arith.extui %0 : i1 to i32
    %c0_i32_0 = arith.constant 0 : i32
    %2 = arith.cmpi ne, %1, %c0_i32_0 : i32
    scf.if %2 {
      %cst_10 = arith.constant 0.000000e+00 : f32
      %12 = vector.broadcast %cst_10 : f32 to vector<512x128xf32>
      %c0_11 = arith.constant 0 : index
      %c0_12 = arith.constant 0 : index
      %13 = vector.load %arg7[%c0_11, %c0_12] : memref<512x128xf32, #tpu.memory_space<vmem>>, vector<512x128xf32>
      tpu.vector_store %arg7[%c0_11, %c0_12], %12 {strides = array<i32>} : memref<512x128xf32, #tpu.memory_space<vmem>>, vector<512x128xf32>,
    } else {
    }
    %c0 = arith.constant 0 : index
    %c0_1 = arith.constant 0 : index
    %3 = vector.load %arg7[%c0, %c0_1] : memref<512x128xf32, #tpu.memory_space<vmem>>, vector<512x128xf32>
    %c0_2 = arith.constant 0 : index
    %c0_3 = arith.constant 0 : index
    %4 = vector.load %arg3[%c0_2, %c0_3] : memref<512x128xbf16, #tpu.memory_space<vmem>>, vector<512x128xbf16>
    %c0_4 = arith.constant 0 : index
    %c0_5 = arith.constant 0 : index
    %5 = vector.load %arg4[%c0_4, %c0_5] : memref<128x128xbf16, #tpu.memory_space<vmem>>, vector<128x128xbf16>
    %cst = arith.constant dense<0.000000e+00> : vector<512x128xf32>
    %6 = tpu.matmul %4, %5, %cst {dimension_numbers = #tpu.dot_dimension_numbers<[1], [0], [0], [1], [0, 0, 1, 1], [], []>} : vector<512x128xbf16>, vector<128x128xbf16>, vector<512x128xf32> -> vector<512x128xf32>
    %7 = arith.addf %3, %6 : vector<512x128xf32>
    %c0_6 = arith.constant 0 : index
    %c0_7 = arith.constant 0 : index
    %8 = vector.load %arg7[%c0_6, %c0_7] : memref<512x128xf32, #tpu.memory_space<vmem>>, vector<512x128xf32>
    tpu.vector_store %arg7[%c0_6, %c0_7], %7 {strides = array<i32>} : memref<512x128xf32, #tpu.memory_space<vmem>>, vector<512x128xf32>,
    %c0_i32_8 = arith.constant 0 : i32
    %9 = arith.cmpi eq, %arg2, %c0_i32_8 : i32
    %10 = arith.extui %9 : i1 to i32
    %c0_i32_9 = arith.constant 0 : i32
    %11 = arith.cmpi ne, %10, %c0_i32_9 : i32
    scf.if %11 {
      %c0_10 = arith.constant 0 : index
      %c0_11 = arith.constant 0 : index
      %12 = vector.load %arg7[%c0_10, %c0_11] : memref<512x128xf32, #tpu.memory_space<vmem>>, vector<512x128xf32>
      %cst_12 = arith.constant dense<0.000000e+00> : vector<128xf32>
      %13 = vector.multi_reduction <add>, %12, %cst_12 [0] : vector<512x128xf32> to vector<128xf32>
      %14 = vector.shape_cast %13 : vector<128xf32> to vector<1x128xf32>
      %15 = arith.mulf %12, %12 : vector<512x128xf32>
      %cst_13 = arith.constant dense<0.000000e+00> : vector<128xf32>
      %16 = vector.multi_reduction <add>, %15, %cst_13 [0] : vector<512x128xf32> to vector<128xf32>
      %17 = vector.shape_cast %16 : vector<128xf32> to vector<1x128xf32>
      %18 = tpu.concatenate %14, %17 in 0 : vector<1x128xf32>, vector<1x128xf32> -> vector<2x128xf32>
      %19 = vector.shape_cast %18 : vector<2x128xf32> to vector<1x2x128xf32>
      %c0_14 = arith.constant 0 : index
      %c0_15 = arith.constant 0 : index
      %c0_16 = arith.constant 0 : index
      %20 = vector.load %arg6[%c0_14, %c0_15, %c0_16] : memref<1x2x128xf32, #tpu.memory_space<vmem>>, vector<1x2x128xf32>
      tpu.vector_store %arg6[%c0_14, %c0_15, %c0_16], %19 {strides = array<i32>} : memref<1x2x128xf32, #tpu.memory_space<vmem>>, vector<1x2x128xf32>,
      %21 = arith.truncf %12 : vector<512x128xf32> to vector<512x128xbf16>
      %c0_17 = arith.constant 0 : index
      %c0_18 = arith.constant 0 : index
      %22 = vector.load %arg5[%c0_17, %c0_18] : memref<512x128xbf16, #tpu.memory_space<vmem>>, vector<512x128xbf16>
      tpu.vector_store %arg5[%c0_17, %c0_18], %21 {strides = array<i32>} : memref<512x128xbf16, #tpu.memory_space<vmem>>, vector<512x128xbf16>,
    } else {
    }
    return
  }
  func.func @transform_0(%arg0: i32, %arg1: i32, %arg2: i32) -> (i32, i32) {
    %c0_i32 = arith.constant 0 : i32
    return %arg0, %arg2 : i32, i32
  }
  func.func @transform_1(%arg0: i32, %arg1: i32, %arg2: i32) -> (i32, i32) {
    %c0_i32 = arith.constant 0 : i32
    return %arg2, %arg1 : i32, i32
  }
  func.func @transform_2(%arg0: i32, %arg1: i32, %arg2: i32) -> (i32, i32) {
    %c0_i32 = arith.constant 0 : i32
    return %arg0, %arg1 : i32, i32
  }
  func.func @transform_3(%arg0: i32, %arg1: i32, %arg2: i32) -> (i32, i32, i32) {
    %c0_i32 = arith.constant 0 : i32
    %c0_i32_0 = arith.constant 0 : i32
    return %arg0, %c0_i32, %arg1 : i32, i32, i32
  }
}

</mosaic_0001>

<llo_original>
// kernel: tpu_custom_call.1
$region0: #{tpu_custom_call.1}
  #allocation0 [shape = 'u32[]', space=smem, size = 0x4, offset = 0x4, fixed_abs, tag = 'smem constant byte address 0x4 - core index']
  #allocation1 [shape = 'u32[72,128]{1,0:T(1,128)}', space=vmem, size = 0x9000, scoped, tag = 'internal scratch']
  #allocation2 [shape = 'f32[512,128]{1,0:T(8,128)}', space=vmem, size = 0x40000, scoped, tag = 'scratch operand']
  %s0 = inlined_call_operand.hbm [shape: bf16[2048,128], index: 0, kind: input, shape index: {}]
  %s1 = inlined_call_operand.hbm [shape: bf16[128,128], index: 1, kind: input, shape index: {}]
  %s2 = inlined_call_operand.hbm [shape: bf16[2048,128], index: 2, kind: output, shape index: {0}]
  %s3 = inlined_call_operand.hbm [shape: f32[4,2,128], index: 3, kind: output, shape index: {1}]
  %4 = xla_tuple %s2, %s3
  %s5 = sld [smem:[#allocation0]]
  $region65: #{tpu_custom_call.1} parent=0
    _
  %s7 = ssub.s32 1, %s5
  %s8 = scalar_select 0, %s7, %s5
  $region1: #{tpu_custom_call.1} parent=0
    #allocation3 [shape = 'u8[262144]{0}', space=vmem, size = 0x40000, scoped, tag = 'input window, operand 0']
    #allocation4 [shape = 's32[2]{0}', space=sflag, size = 0x8, scoped, tag = 'scoped memory for tpu_custom_call.1']
    #allocation5 [shape = 's32[2]{0}', space=sflag, size = 0x8, scoped, tag = 'scoped memory for tpu_custom_call.1']
    #allocation6 [shape = 'u8[32768]{0}', space=vmem, size = 0x8000, scoped, tag = 'input window, operand 1, single buffered']
    #allocation7 [shape = 's32[1]{0}', space=sflag, size = 0x4, scoped, tag = 'scoped memory for tpu_custom_call.1']
    #allocation8 [shape = 'u8[262144]{0}', space=vmem, size = 0x40000, scoped, tag = 'output window, operand 0']
    #allocation9 [shape = 'u8[2048]{0}', space=vmem, size = 0x800, scoped, tag = 'output window, operand 1']
    #allocation10 [shape = 's32[2]{0}', space=sflag, size = 0x8, scoped, tag = 'scoped memory for tpu_custom_call.1']
    %9 = vsyncpa [#allocation4], 0
    %s10 = scalar_lea.sflag [#allocation4], 1
    %11 = vsyncpa %s10, 0
    %12 = vsyncpa [#allocation7], 0
    %13 = vsyncpa [#allocation5], 0
    %s14 = scalar_lea.sflag [#allocation5], 1
    %15 = vsyncpa %s14, 0
    %16 = vsyncpa [#allocation10], 0
    %s17 = scalar_lea.sflag [#allocation10], 1
    %18 = vsyncpa %s17, 0
    loop: start=0, step=1, limit=6
    $region2: #{tpu_custom_call.1} parent=1 // loop_pre_header
      _
    $region3: #{tpu_custom_call.1} parent=1 // loop_header
      %s20 = sphi 0, %s24
      %p21 = scmp.ge.s32.totalorder %s20, 6
      %s27 = sphi 0, %s46
      %s28 = sphi 0, %s42
      %s29 = sphi 0, %s38
      %s30 = sphi 0, %s27
      %s31 = sphi 0, %s28
      %s32 = sphi 0, %s29
      %s33 = sphi 0, %s30
      %s34 = sphi 0, %s31
      %s35 = sphi 0, %s32
      %s51 = sphi 0, %s53
      %s54 = sphi 0, %s51
      %s55 = sphi 0, %s54
      %s71 = sphi 0, %s55
      %s79 = sphi 0, %s81
      %s82 = sphi 0, %s79
      %s83 = sphi 0, %s82
      %s99 = sphi 0, %s83
      %s107 = sphi 0, %s109
      %s110 = sphi 0, %s107
      %s111 = sphi 0, %s110
      %s127 = sphi 0, %s111
      %s135 = sphi 0, %s137
      %s138 = sphi 0, %s135
      %s139 = sphi 0, %s138
      %s155 = sphi 0, %s139
    $region4: #{tpu_custom_call.1} parent=1 // loop_header_branch
      %23 = sbr.rel (%p21) target = $region8
    $region5: #{tpu_custom_call.1} parent=1 // loop_body
      %s25 = ssub.s32 %s20, 1
      %s26 = ssub.s32 %s20, 2
      %s36 = sadd.s32 1, %s29
      %p37 = scmp.ge.s32.totalorder %s36, 1
      %s38 = scalar_select %p37, 0, %s36
      %s39 = sadd.s32 1, %s28
      %s40 = scalar_select %p37, %s39, %s28
      %p41 = scmp.ge.s32.totalorder %s40, 1
      %s42 = scalar_select %p41, 0, %s40
      %s43 = sadd.s32 1, %s27
      %s44 = scalar_select %p41, %s43, %s27
      %p45 = scmp.ge.s32.totalorder %s44, 4
      %s46 = scalar_select %p45, 0, %s44
      %s47 = ssub.s32 %s27, %s46
      %s48 = ssub.s32 %s29, %s38
      %s49 = sor.u32 %s47, %s48
      %p50 = scmp.eq.s32.totalorder %s49, 0
      %s52 = sadd.s32 %s51, 1
      %s53 = scalar_select %p50, %s51, %s52
      %p56 = pneg %p50
      %p57 = scmp.eq.s32.totalorder %s20, 3
      %p58 = por %p56, %p57
      %p59 = scmp.ne.s32.totalorder %s51, %s54
      %p60 = scmp.eq.s32.totalorder %s20, 0
      %p61 = por %p59, %p60
      %p62 = scmp.ne.s32.totalorder %s51, %s54
      %p63 = scmp.eq.s32.totalorder %s25, 3
      %p64 = por %p62, %p63
      %p65 = scmp.ne.s32.totalorder %s54, %s55
      %p66 = scmp.eq.s32.totalorder %s25, 0
      %p67 = por %p65, %p66
      %p68 = scmp.ne.s32.totalorder %s54, %s55
      %p69 = scmp.eq.s32.totalorder %s26, 3
      %p70 = por %p68, %p69
      %p72 = scmp.ne.s32.totalorder %s55, %s71
      %p73 = scmp.eq.s32.totalorder %s26, 0
      %p74 = por %p72, %p73
      %s75 = ssub.s32 %s29, %s38
      %s76 = ssub.s32 %s28, %s42
      %s77 = sor.u32 %s75, %s76
      %p78 = scmp.eq.s32.totalorder %s77, 0
      %s80 = sadd.s32 %s79, 1
      %s81 = scalar_select %p78, %s79, %s80
      %p84 = pneg %p78
      %p85 = scmp.eq.s32.totalorder %s20, 3
      %p86 = por %p84, %p85
      %p87 = scmp.ne.s32.totalorder %s79, %s82
      %p88 = scmp.eq.s32.totalorder %s20, 0
      %p89 = por %p87, %p88
      %p90 = scmp.ne.s32.totalorder %s79, %s82
      %p91 = scmp.eq.s32.totalorder %s25, 3
      %p92 = por %p90, %p91
      %p93 = scmp.ne.s32.totalorder %s82, %s83
      %p94 = scmp.eq.s32.totalorder %s25, 0
      %p95 = por %p93, %p94
      %p96 = scmp.ne.s32.totalorder %s82, %s83
      %p97 = scmp.eq.s32.totalorder %s26, 3
      %p98 = por %p96, %p97
      %p100 = scmp.ne.s32.totalorder %s83, %s99
      %p101 = scmp.eq.s32.totalorder %s26, 0
      %p102 = por %p100, %p101
      %s103 = ssub.s32 %s27, %s46
      %s104 = ssub.s32 %s28, %s42
      %s105 = sor.u32 %s103, %s104
      %p106 = scmp.eq.s32.totalorder %s105, 0
      %s108 = sadd.s32 %s107, 1
      %s109 = scalar_select %p106, %s107, %s108
      %p112 = pneg %p106
      %p113 = scmp.eq.s32.totalorder %s20, 3
      %p114 = por %p112, %p113
      %p115 = scmp.ne.s32.totalorder %s107, %s110
      %p116 = scmp.eq.s32.totalorder %s20, 0
      %p117 = por %p115, %p116
      %p118 = scmp.ne.s32.totalorder %s107, %s110
      %p119 = scmp.eq.s32.totalorder %s25, 3
      %p120 = por %p118, %p119
      %p121 = scmp.ne.s32.totalorder %s110, %s111
      %p122 = scmp.eq.s32.totalorder %s25, 0
      %p123 = por %p121, %p122
      %p124 = scmp.ne.s32.totalorder %s110, %s111
      %p125 = scmp.eq.s32.totalorder %s26, 3
      %p126 = por %p124, %p125
      %p128 = scmp.ne.s32.totalorder %s111, %s127
      %p129 = scmp.eq.s32.totalorder %s26, 0
      %p130 = por %p128, %p129
      %s131 = ssub.s32 %s27, %s46
      %s132 = ssub.s32 %s28, %s42
      %s133 = sor.u32 %s131, %s132
      %p134 = scmp.eq.s32.totalorder %s133, 0
      %s136 = sadd.s32 %s135, 1
      %s137 = scalar_select %p134, %s135, %s136
      %p140 = pneg %p134
      %p141 = scmp.eq.s32.totalorder %s20, 3
      %p142 = por %p140, %p141
      %p143 = scmp.ne.s32.totalorder %s135, %s138
      %p144 = scmp.eq.s32.totalorder %s20, 0
      %p145 = por %p143, %p144
      %p146 = scmp.ne.s32.totalorder %s135, %s138
      %p147 = scmp.eq.s32.totalorder %s25, 3
      %p148 = por %p146, %p147
      %p149 = scmp.ne.s32.totalorder %s138, %s139
      %p150 = scmp.eq.s32.totalorder %s25, 0
      %p151 = por %p149, %p150
      %p152 = scmp.ne.s32.totalorder %s138, %s139
      %p153 = scmp.eq.s32.totalorder %s26, 3
      %p154 = por %p152, %p153
      %p156 = scmp.ne.s32.totalorder %s139, %s155
      %p157 = scmp.eq.s32.totalorder %s26, 0
      %p158 = por %p156, %p157
      %p159 = scmp.le.s32.totalorder 1, %s20
      %p160 = scmp.lt.s32.totalorder %s20, 5
      %p161 = pnand %p159, %p160
      %p162 = pneg %p161
      // Predicated region
      $region9: #{tpu_custom_call.1} parent=5 // pred_check
        _
      $region10: #{tpu_custom_call.1} parent=5 // pred_check_branch
        %164 = sbr.rel (%p161) target = $region12
      $region11: #{tpu_custom_call.1} parent=5 // pred_region
        %s165 = ssub.s32 %s20, 1
        // Predicated region
        $region13: #{tpu_custom_call.1} parent=11 // pred_check
          %p166 = pneg %p95
        $region14: #{tpu_custom_call.1} parent=11 // pred_check_branch
          %168 = sbr.rel (%p166) target = $region16
        $region15: #{tpu_custom_call.1} parent=11 // pred_region
          %s169 = smul.u32 16, %s32
          %171 = vsyncadd [#allocation7], 0
          %s172 = sadd.s32 %s31, %s169
          %s173 = smul.addr %s172, 4
          %s174 = scalar_lea.hbm %s1, %s173
          %s175 = sshll.u32 %s174, 4
          %s176 = int_to_ptr.hbm [resolvable:$true] %s175
          %s177 = sshll.u32 [#allocation6], 4
          %s178 = int_to_ptr.vmem [resolvable:$true] %s177
          %183 = dma.hbm_to_vmem [thread:$0]  %s176, 1024, %s178, [#allocation7], 64, 64, 4
        $region16: #{tpu_custom_call.1} parent=11 // pred_fallthru
          _
      $region12: #{tpu_custom_call.1} parent=5 // pred_fallthru
        _
      %p184 = scmp.lt.s32.totalorder %s20, 4
      // Predicated region
      $region17: #{tpu_custom_call.1} parent=5 // pred_check
        %p185 = pneg %p184
      $region18: #{tpu_custom_call.1} parent=5 // pred_check_branch
        %187 = sbr.rel (%p185) target = $region20
      $region19: #{tpu_custom_call.1} parent=5 // pred_region
        // Predicated region
        $region21: #{tpu_custom_call.1} parent=19 // pred_check
          %p188 = pneg %p61
        $region22: #{tpu_custom_call.1} parent=19 // pred_check_branch
          %190 = sbr.rel (%p188) target = $region24
        $region23: #{tpu_custom_call.1} parent=19 // pred_region
          %s191 = sand.u32 %s51, 1
          %s192 = scalar_lea.sflag [#allocation4], %s191
          %s193 = sand.u32 %s51, 1
          %s194 = smul.addr %s193, 256
          %s195 = scalar_lea.vmem [#allocation3], %s194
          %s196 = smul.u32 64, %s27
          %198 = vsyncadd %s192, 0
          %s199 = sadd.s32 %s29, %s196
          %s200 = smul.addr %s199, 4
          %s201 = scalar_lea.hbm %s0, %s200
          %s202 = sshll.u32 %s201, 4
          %s203 = int_to_ptr.hbm [resolvable:$true] %s202
          %s204 = sshll.u32 %s195, 4
          %s205 = int_to_ptr.vmem [resolvable:$true] %s204
          %210 = dma.hbm_to_vmem [thread:$0]  %s203, 4096, %s205, %s192, 64, 64, 4
        $region24: #{tpu_custom_call.1} parent=19 // pred_fallthru
          _
      $region20: #{tpu_custom_call.1} parent=5 // pred_fallthru
        _
      %p211 = scmp.le.s32.totalorder 1, %s20
      %p212 = scmp.lt.s32.totalorder %s20, 5
      %p213 = pnand %p211, %p212
      %p214 = pneg %p213
      // Predicated region
      $region25: #{tpu_custom_call.1} parent=5 // pred_check
        _
      $region26: #{tpu_custom_call.1} parent=5 // pred_check_branch
        %216 = sbr.rel (%p213) target = $region28
      $region27: #{tpu_custom_call.1} parent=5 // pred_region
        %s217 = ssub.s32 %s20, 1
        %s218 = sand.u32 %s54, 1
        %s219 = scalar_lea.sflag [#allocation4], %s218
        %s220 = sand.u32 %s54, 1
        %s221 = smul.addr %s220, 256
        %s222 = scalar_lea.vmem [#allocation3], %s221
        // Predicated region
        $region29: #{tpu_custom_call.1} parent=27 // pred_check
          %p223 = pneg %p67
        $region30: #{tpu_custom_call.1} parent=27 // pred_check_branch
          %225 = sbr.rel (%p223) target = $region32
        $region31: #{tpu_custom_call.1} parent=27 // pred_region
          %227 = dma.done %s219, 4096
        $region32: #{tpu_custom_call.1} parent=27 // pred_fallthru
          _
        // Predicated region
        $region33: #{tpu_custom_call.1} parent=27 // pred_check
          %p228 = pneg %p95
        $region34: #{tpu_custom_call.1} parent=27 // pred_check_branch
          %230 = sbr.rel (%p228) target = $region36
        $region35: #{tpu_custom_call.1} parent=27 // pred_region
          %232 = dma.done [#allocation7], 1024
        $region36: #{tpu_custom_call.1} parent=27 // pred_fallthru
          _
        %s233 = sand.u32 %s54, 1
        %s234 = scalar_lea.sflag [#allocation4], %s233
        %s235 = sand.u32 %s54, 1
        %s236 = smul.addr %s235, 256
        %s237 = scalar_lea.vmem [#allocation3], %s236
        %p238 = pneg %p67
        %p239 = pneg %p64
        %p240 = pneg %p95
        %p241 = pneg %p92
        %p242 = pneg %p123
        %p243 = pneg %p120
        %s244 = sand.u32 %s110, 1
        %s245 = scalar_lea.sflag [#allocation5], %s244
        %s246 = sand.u32 %s110, 1
        %s247 = smul.addr %s246, 256
        %s248 = scalar_lea.vmem [#allocation8], %s247
        %p249 = pneg %p151
        %p250 = pneg %p148
        %s251 = sand.u32 %s138, 1
        %s252 = scalar_lea.sflag [#allocation10], %s251
        %s253 = sand.u32 %s138, 1
        %s254 = smul.addr %s253, 2
        %s255 = scalar_lea.vmem [#allocation9], %s254
        %s256 = smul.u32 64, %s30
        %s257 = smul.u32 16, %s32
        %s258 = smul.u32 64, %s30
        %p259 = scmp.eq.s32.totalorder %s32, 0
        // Predicated region
        $region37: #{tpu_custom_call.1} parent=27 // pred_check
          %p260 = pneg %p259
        $region38: #{tpu_custom_call.1} parent=27 // pred_check_branch
          %262 = sbr.rel (%p260) target = $region40
        $region39: #{tpu_custom_call.1} parent=27 // pred_region
          %263 = vst [vmem:[#allocation2] sm:$0xff] 0.0
          %264 = vst [vmem:[#allocation2 + $0x8] sm:$0xff] 0.0
          %265 = vst [vmem:[#allocation2 + $0x10] sm:$0xff] 0.0
          %266 = vst [vmem:[#allocation2 + $0x18] sm:$0xff] 0.0
          %267 = vst [vmem:[#allocation2 + $0x20] sm:$0xff] 0.0
          %268 = vst [vmem:[#allocation2 + $0x28] sm:$0xff] 0.0
          %269 = vst [vmem:[#allocation2 + $0x30] sm:$0xff] 0.0
          %270 = vst [vmem:[#allocation2 + $0x38] sm:$0xff] 0.0
          %271 = vst [vmem:[#allocation2 + $0x40] sm:$0xff] 0.0
          %272 = vst [vmem:[#allocation2 + $0x48] sm:$0xff] 0.0
          %273 = vst [vmem:[#allocation2 + $0x50] sm:$0xff] 0.0
          %274 = vst [vmem:[#allocation2 + $0x58] sm:$0xff] 0.0
          %275 = vst [vmem:[#allocation2 + $0x60] sm:$0xff] 0.0
          %276 = vst [vmem:[#allocation2 + $0x68] sm:$0xff] 0.0
          %277 = vst [vmem:[#allocation2 + $0x70] sm:$0xff] 0.0
          %278 = vst [vmem:[#allocation2 + $0x78] sm:$0xff] 0.0
          %279 = vst [vmem:[#allocation2 + $0x80] sm:$0xff] 0.0
          %280 = vst [vmem:[#allocation2 + $0x88] sm:$0xff] 0.0
          %281 = vst [vmem:[#allocation2 + $0x90] sm:$0xff] 0.0
          %282 = vst [vmem:[#allocation2 + $0x98] sm:$0xff] 0.0
          %283 = vst [vmem:[#allocation2 + $0xa0] sm:$0xff] 0.0
          %284 = vst [vmem:[#allocation2 + $0xa8] sm:$0xff] 0.0
          %285 = vst [vmem:[#allocation2 + $0xb0] sm:$0xff] 0.0
          %286 = vst [vmem:[#allocation2 + $0xb8] sm:$0xff] 0.0
          %287 = vst [vmem:[#allocation2 + $0xc0] sm:$0xff] 0.0
          %288 = vst [vmem:[#allocation2 + $0xc8] sm:$0xff] 0.0
          %289 = vst [vmem:[#allocation2 + $0xd0] sm:$0xff] 0.0
          %290 = vst [vmem:[#allocation2 + $0xd8] sm:$0xff] 0.0
          %291 = vst [vmem:[#allocation2 + $0xe0] sm:$0xff] 0.0
          %292 = vst [vmem:[#allocation2 + $0xe8] sm:$0xff] 0.0
          %293 = vst [vmem:[#allocation2 + $0xf0] sm:$0xff] 0.0
          %294 = vst [vmem:[#allocation2 + $0xf8] sm:$0xff] 0.0
          %295 = vst [vmem:[#allocation2 + $0x100] sm:$0xff] 0.0
          %296 = vst [vmem:[#allocation2 + $0x108] sm:$0xff] 0.0
          %297 = vst [vmem:[#allocation2 + $0x110] sm:$0xff] 0.0
          %298 = vst [vmem:[#allocation2 + $0x118] sm:$0xff] 0.0
          %299 = vst [vmem:[#allocation2 + $0x120] sm:$0xff] 0.0
          %300 = vst [vmem:[#allocation2 + $0x128] sm:$0xff] 0.0
          %301 = vst [vmem:[#allocation2 + $0x130] sm:$0xff] 0.0
          %302 = vst [vmem:[#allocation2 + $0x138] sm:$0xff] 0.0
          %303 = vst [vmem:[#allocation2 + $0x140] sm:$0xff] 0.0
          %304 = vst [vmem:[#allocation2 + $0x148] sm:$0xff] 0.0
          %305 = vst [vmem:[#allocation2 + $0x150] sm:$0xff] 0.0
          %306 = vst [vmem:[#allocation2 + $0x158] sm:$0xff] 0.0
          %307 = vst [vmem:[#allocation2 + $0x160] sm:$0xff] 0.0
          %308 = vst [vmem:[#allocation2 + $0x168] sm:$0xff] 0.0
          %309 = vst [vmem:[#allocation2 + $0x170] sm:$0xff] 0.0
          %310 = vst [vmem:[#allocation2 + $0x178] sm:$0xff] 0.0
          %311 = vst [vmem:[#allocation2 + $0x180] sm:$0xff] 0.0
          %312 = vst [vmem:[#allocation2 + $0x188] sm:$0xff] 0.0
          %313 = vst [vmem:[#allocation2 + $0x190] sm:$0xff] 0.0
          %314 = vst [vmem:[#allocation2 + $0x198] sm:$0xff] 0.0
          %315 = vst [vmem:[#allocation2 + $0x1a0] sm:$0xff] 0.0
          %316 = vst [vmem:[#allocation2 + $0x1a8] sm:$0xff] 0.0
          %317 = vst [vmem:[#allocation2 + $0x1b0] sm:$0xff] 0.0
          %318 = vst [vmem:[#allocation2 + $0x1b8] sm:$0xff] 0.0
          %319 = vst [vmem:[#allocation2 + $0x1c0] sm:$0xff] 0.0
          %320 = vst [vmem:[#allocation2 + $0x1c8] sm:$0xff] 0.0
          %321 = vst [vmem:[#allocation2 + $0x1d0] sm:$0xff] 0.0
          %322 = vst [vmem:[#allocation2 + $0x1d8] sm:$0xff] 0.0
          %323 = vst [vmem:[#allocation2 + $0x1e0] sm:$0xff] 0.0
          %324 = vst [vmem:[#allocation2 + $0x1e8] sm:$0xff] 0.0
          %325 = vst [vmem:[#allocation2 + $0x1f0] sm:$0xff] 0.0
          %326 = vst [vmem:[#allocation2 + $0x1f8] sm:$0xff] 0.0
        $region40: #{tpu_custom_call.1} parent=27 // pred_fallthru
          _
        %v327 = vld [vmem:[#allocation2] sm:$0xff]
        %v328 = vld [vmem:[#allocation2 + $0x8] sm:$0xff]
        %v329 = vld [vmem:[#allocation2 + $0x10] sm:$0xff]
        %v330 = vld [vmem:[#allocation2 + $0x18] sm:$0xff]
        %v331 = vld [vmem:[#allocation2 + $0x20] sm:$0xff]
        %v332 = vld [vmem:[#allocation2 + $0x28] sm:$0xff]
        %v333 = vld [vmem:[#allocation2 + $0x30] sm:$0xff]
        %v334 = vld [vmem:[#allocation2 + $0x38] sm:$0xff]
        %v335 = vld [vmem:[#allocation2 + $0x40] sm:$0xff]
        %v336 = vld [vmem:[#allocation2 + $0x48] sm:$0xff]
        %v337 = vld [vmem:[#allocation2 + $0x50] sm:$0xff]
        %v338 = vld [vmem:[#allocation2 + $0x58] sm:$0xff]
        %v339 = vld [vmem:[#allocation2 + $0x60] sm:$0xff]
        %v340 = vld [vmem:[#allocation2 + $0x68] sm:$0xff]
        %v341 = vld [vmem:[#allocation2 + $0x70] sm:$0xff]
        %v342 = vld [vmem:[#allocation2 + $0x78] sm:$0xff]
        %v343 = vld [vmem:[#allocation2 + $0x80] sm:$0xff]
        %v344 = vld [vmem:[#allocation2 + $0x88] sm:$0xff]
        %v345 = vld [vmem:[#allocation2 + $0x90] sm:$0xff]
        %v346 = vld [vmem:[#allocation2 + $0x98] sm:$0xff]
        %v347 = vld [vmem:[#allocation2 + $0xa0] sm:$0xff]
        %v348 = vld [vmem:[#allocation2 + $0xa8] sm:$0xff]
        %v349 = vld [vmem:[#allocation2 + $0xb0] sm:$0xff]
        %v350 = vld [vmem:[#allocation2 + $0xb8] sm:$0xff]
        %v351 = vld [vmem:[#allocation2 + $0xc0] sm:$0xff]
        %v352 = vld [vmem:[#allocation2 + $0xc8] sm:$0xff]
        %v353 = vld [vmem:[#allocation2 + $0xd0] sm:$0xff]
        %v354 = vld [vmem:[#allocation2 + $0xd8] sm:$0xff]
        %v355 = vld [vmem:[#allocation2 + $0xe0] sm:$0xff]
        %v356 = vld [vmem:[#allocation2 + $0xe8] sm:$0xff]
        %v357 = vld [vmem:[#allocation2 + $0xf0] sm:$0xff]
        %v358 = vld [vmem:[#allocation2 + $0xf8] sm:$0xff]
        %v359 = vld [vmem:[#allocation2 + $0x100] sm:$0xff]
        %v360 = vld [vmem:[#allocation2 + $0x108] sm:$0xff]
        %v361 = vld [vmem:[#allocation2 + $0x110] sm:$0xff]
        %v362 = vld [vmem:[#allocation2 + $0x118] sm:$0xff]
        %v363 = vld [vmem:[#allocation2 + $0x120] sm:$0xff]
        %v364 = vld [vmem:[#allocation2 + $0x128] sm:$0xff]
        %v365 = vld [vmem:[#allocation2 + $0x130] sm:$0xff]
        %v366 = vld [vmem:[#allocation2 + $0x138] sm:$0xff]
        %v367 = vld [vmem:[#allocation2 + $0x140] sm:$0xff]
        %v368 = vld [vmem:[#allocation2 + $0x148] sm:$0xff]
        %v369 = vld [vmem:[#allocation2 + $0x150] sm:$0xff]
        %v370 = vld [vmem:[#allocation2 + $0x158] sm:$0xff]
        %v371 = vld [vmem:[#allocation2 + $0x160] sm:$0xff]
        %v372 = vld [vmem:[#allocation2 + $0x168] sm:$0xff]
        %v373 = vld [vmem:[#allocation2 + $0x170] sm:$0xff]
        %v374 = vld [vmem:[#allocation2 + $0x178] sm:$0xff]
        %v375 = vld [vmem:[#allocation2 + $0x180] sm:$0xff]
        %v376 = vld [vmem:[#allocation2 + $0x188] sm:$0xff]
        %v377 = vld [vmem:[#allocation2 + $0x190] sm:$0xff]
        %v378 = vld [vmem:[#allocation2 + $0x198] sm:$0xff]
        %v379 = vld [vmem:[#allocation2 + $0x1a0] sm:$0xff]
        %v380 = vld [vmem:[#allocation2 + $0x1a8] sm:$0xff]
        %v381 = vld [vmem:[#allocation2 + $0x1b0] sm:$0xff]
        %v382 = vld [vmem:[#allocation2 + $0x1b8] sm:$0xff]
        %v383 = vld [vmem:[#allocation2 + $0x1c0] sm:$0xff]
        %v384 = vld [vmem:[#allocation2 + $0x1c8] sm:$0xff]
        %v385 = vld [vmem:[#allocation2 + $0x1d0] sm:$0xff]
        %v386 = vld [vmem:[#allocation2 + $0x1d8] sm:$0xff]
        %v387 = vld [vmem:[#allocation2 + $0x1e0] sm:$0xff]
        %v388 = vld [vmem:[#allocation2 + $0x1e8] sm:$0xff]
        %v389 = vld [vmem:[#allocation2 + $0x1f0] sm:$0xff]
        %v390 = vld [vmem:[#allocation2 + $0x1f8] sm:$0xff]
        %v391 = vld [vmem:[%s222] sm:$0xf]
        %v392 = vld [vmem:[%s222 + $0x4] sm:$0xf]
        %v393 = vld [vmem:[%s222 + $0x8] sm:$0xf]
        %v394 = vld [vmem:[%s222 + $0xc] sm:$0xf]
        %v395 = vld [vmem:[%s222 + $0x10] sm:$0xf]
        %v396 = vld [vmem:[%s222 + $0x14] sm:$0xf]
        %v397 = vld [vmem:[%s222 + $0x18] sm:$0xf]
        %v398 = vld [vmem:[%s222 + $0x1c] sm:$0xf]
        %v399 = vld [vmem:[%s222 + $0x20] sm:$0xf]
        %v400 = vld [vmem:[%s222 + $0x24] sm:$0xf]
        %v401 = vld [vmem:[%s222 + $0x28] sm:$0xf]
        %v402 = vld [vmem:[%s222 + $0x2c] sm:$0xf]
        %v403 = vld [vmem:[%s222 + $0x30] sm:$0xf]
        %v404 = vld [vmem:[%s222 + $0x34] sm:$0xf]
        %v405 = vld [vmem:[%s222 + $0x38] sm:$0xf]
        %v406 = vld [vmem:[%s222 + $0x3c] sm:$0xf]
        %v407 = vld [vmem:[%s222 + $0x40] sm:$0xf]
        %v408 = vld [vmem:[%s222 + $0x44] sm:$0xf]
        %v409 = vld [vmem:[%s222 + $0x48] sm:$0xf]
        %v410 = vld [vmem:[%s222 + $0x4c] sm:$0xf]
        %v411 = vld [vmem:[%s222 + $0x50] sm:$0xf]
        %v412 = vld [vmem:[%s222 + $0x54] sm:$0xf]
        %v413 = vld [vmem:[%s222 + $0x58] sm:$0xf]
        %v414 = vld [vmem:[%s222 + $0x5c] sm:$0xf]
        %v415 = vld [vmem:[%s222 + $0x60] sm:$0xf]
        %v416 = vld [vmem:[%s222 + $0x64] sm:$0xf]
        %v417 = vld [vmem:[%s222 + $0x68] sm:$0xf]
        %v418 = vld [vmem:[%s222 + $0x6c] sm:$0xf]
        %v419 = vld [vmem:[%s222 + $0x70] sm:$0xf]
        %v420 = vld [vmem:[%s222 + $0x74] sm:$0xf]
        %v421 = vld [vmem:[%s222 + $0x78] sm:$0xf]
        %v422 = vld [vmem:[%s222 + $0x7c] sm:$0xf]
        %v423 = vld [vmem:[%s222 + $0x80] sm:$0xf]
        %v424 = vld [vmem:[%s222 + $0x84] sm:$0xf]
        %v425 = vld [vmem:[%s222 + $0x88] sm:$0xf]
        %v426 = vld [vmem:[%s222 + $0x8c] sm:$0xf]
        %v427 = vld [vmem:[%s222 + $0x90] sm:$0xf]
        %v428 = vld [vmem:[%s222 + $0x94] sm:$0xf]
        %v429 = vld [vmem:[%s222 + $0x98] sm:$0xf]
        %v430 = vld [vmem:[%s222 + $0x9c] sm:$0xf]
        %v431 = vld [vmem:[%s222 + $0xa0] sm:$0xf]
        %v432 = vld [vmem:[%s222 + $0xa4] sm:$0xf]
        %v433 = vld [vmem:[%s222 + $0xa8] sm:$0xf]
        %v434 = vld [vmem:[%s222 + $0xac] sm:$0xf]
        %v435 = vld [vmem:[%s222 + $0xb0] sm:$0xf]
        %v436 = vld [vmem:[%s222 + $0xb4] sm:$0xf]
        %v437 = vld [vmem:[%s222 + $0xb8] sm:$0xf]
        %v438 = vld [vmem:[%s222 + $0xbc] sm:$0xf]
        %v439 = vld [vmem:[%s222 + $0xc0] sm:$0xf]
        %v440 = vld [vmem:[%s222 + $0xc4] sm:$0xf]
        %v441 = vld [vmem:[%s222 + $0xc8] sm:$0xf]
        %v442 = vld [vmem:[%s222 + $0xcc] sm:$0xf]
        %v443 = vld [vmem:[%s222 + $0xd0] sm:$0xf]
        %v444 = vld [vmem:[%s222 + $0xd4] sm:$0xf]
        %v445 = vld [vmem:[%s222 + $0xd8] sm:$0xf]
        %v446 = vld [vmem:[%s222 + $0xdc] sm:$0xf]
        %v447 = vld [vmem:[%s222 + $0xe0] sm:$0xf]
        %v448 = vld [vmem:[%s222 + $0xe4] sm:$0xf]
        %v449 = vld [vmem:[%s222 + $0xe8] sm:$0xf]
        %v450 = vld [vmem:[%s222 + $0xec] sm:$0xf]
        %v451 = vld [vmem:[%s222 + $0xf0] sm:$0xf]
        %v452 = vld [vmem:[%s222 + $0xf4] sm:$0xf]
        %v453 = vld [vmem:[%s222 + $0xf8] sm:$0xf]
        %v454 = vld [vmem:[%s222 + $0xfc] sm:$0xf]
        %v455 = vld [vmem:[#allocation6] sm:$0xf]
        %v456 = vld [vmem:[#allocation6 + $0x4] sm:$0xf]
        %v457 = vld [vmem:[#allocation6 + $0x8] sm:$0xf]
        %v458 = vld [vmem:[#allocation6 + $0xc] sm:$0xf]
        %v459 = vld [vmem:[#allocation6 + $0x10] sm:$0xf]
        %v460 = vld [vmem:[#allocation6 + $0x14] sm:$0xf]
        %v461 = vld [vmem:[#allocation6 + $0x18] sm:$0xf]
        %v462 = vld [vmem:[#allocation6 + $0x1c] sm:$0xf]
        %v463 = vld [vmem:[#allocation6 + $0x20] sm:$0xf]
        %v464 = vld [vmem:[#allocation6 + $0x24] sm:$0xf]
        %v465 = vld [vmem:[#allocation6 + $0x28] sm:$0xf]
        %v466 = vld [vmem:[#allocation6 + $0x2c] sm:$0xf]
        %v467 = vld [vmem:[#allocation6 + $0x30] sm:$0xf]
        %v468 = vld [vmem:[#allocation6 + $0x34] sm:$0xf]
        %v469 = vld [vmem:[#allocation6 + $0x38] sm:$0xf]
        %v470 = vld [vmem:[#allocation6 + $0x3c] sm:$0xf]
        %v535 = vunpack.c.l.b16 %v391
        %v536 = vunpack.c.l.b16 %v392
        %v537 = vunpack.c.l.b16 %v393
        %v538 = vunpack.c.l.b16 %v394
        %v539 = vunpack.c.l.b16 %v395
        %v540 = vunpack.c.l.b16 %v396
        %v541 = vunpack.c.l.b16 %v397
        %v542 = vunpack.c.l.b16 %v398
        %v543 = vunpack.c.l.b16 %v399
        %v544 = vunpack.c.l.b16 %v400
        %v545 = vunpack.c.l.b16 %v401
        %v546 = vunpack.c.l.b16 %v402
        %v547 = vunpack.c.l.b16 %v403
        %v548 = vunpack.c.l.b16 %v404
        %v549 = vunpack.c.l.b16 %v405
        %v550 = vunpack.c.l.b16 %v406
        %v551 = vunpack.c.l.b16 %v407
        %v552 = vunpack.c.l.b16 %v408
        %v553 = vunpack.c.l.b16 %v409
        %v554 = vunpack.c.l.b16 %v410
        %v555 = vunpack.c.l.b16 %v411
        %v556 = vunpack.c.l.b16 %v412
        %v557 = vunpack.c.l.b16 %v413
        %v558 = vunpack.c.l.b16 %v414
        %v559 = vunpack.c.l.b16 %v415
        %v560 = vunpack.c.l.b16 %v416
        %v561 = vunpack.c.l.b16 %v417
        %v562 = vunpack.c.l.b16 %v418
        %v563 = vunpack.c.l.b16 %v419
        %v564 = vunpack.c.l.b16 %v420
        %v565 = vunpack.c.l.b16 %v421
        %v566 = vunpack.c.l.b16 %v422
        %v567 = vunpack.c.l.b16 %v423
        %v568 = vunpack.c.l.b16 %v424
        %v569 = vunpack.c.l.b16 %v425
        %v570 = vunpack.c.l.b16 %v426
        %v571 = vunpack.c.l.b16 %v427
        %v572 = vunpack.c.l.b16 %v428
        %v573 = vunpack.c.l.b16 %v429
        %v574 = vunpack.c.l.b16 %v430
        %v575 = vunpack.c.l.b16 %v431
        %v576 = vunpack.c.l.b16 %v432
        %v577 = vunpack.c.l.b16 %v433
        %v578 = vunpack.c.l.b16 %v434
        %v579 = vunpack.c.l.b16 %v435
        %v580 = vunpack.c.l.b16 %v436
        %v581 = vunpack.c.l.b16 %v437
        %v582 = vunpack.c.l.b16 %v438
        %v583 = vunpack.c.l.b16 %v439
        %v584 = vunpack.c.l.b16 %v440
        %v585 = vunpack.c.l.b16 %v441
        %v586 = vunpack.c.l.b16 %v442
        %v587 = vunpack.c.l.b16 %v443
        %v588 = vunpack.c.l.b16 %v444
        %v589 = vunpack.c.l.b16 %v445
        %v590 = vunpack.c.l.b16 %v446
        %v591 = vunpack.c.l.b16 %v447
        %v592 = vunpack.c.l.b16 %v448
        %v593 = vunpack.c.l.b16 %v449
        %v594 = vunpack.c.l.b16 %v450
        %v595 = vunpack.c.l.b16 %v451
        %v596 = vunpack.c.l.b16 %v452
        %v597 = vunpack.c.l.b16 %v453
        %v598 = vunpack.c.l.b16 %v454
        %v599 = vpack.c.b16 %v536, %v535
        %v600 = vpack.c.b16 %v538, %v537
        %v601 = vpack.c.b16 %v540, %v539
        %v602 = vpack.c.b16 %v542, %v541
        %v603 = vpack.c.b16 %v544, %v543
        %v604 = vpack.c.b16 %v546, %v545
        %v605 = vpack.c.b16 %v548, %v547
        %v606 = vpack.c.b16 %v550, %v549
        %v607 = vpack.c.b16 %v552, %v551
        %v608 = vpack.c.b16 %v554, %v553
        %v609 = vpack.c.b16 %v556, %v555
        %v610 = vpack.c.b16 %v558, %v557
        %v611 = vpack.c.b16 %v560, %v559
        %v612 = vpack.c.b16 %v562, %v561
        %v613 = vpack.c.b16 %v564, %v563
        %v614 = vpack.c.b16 %v566, %v565
        %v615 = vpack.c.b16 %v568, %v567
        %v616 = vpack.c.b16 %v570, %v569
        %v617 = vpack.c.b16 %v572, %v571
        %v618 = vpack.c.b16 %v574, %v573
        %v619 = vpack.c.b16 %v576, %v575
        %v620 = vpack.c.b16 %v578, %v577
        %v621 = vpack.c.b16 %v580, %v579
        %v622 = vpack.c.b16 %v582, %v581
        %v623 = vpack.c.b16 %v584, %v583
        %v624 = vpack.c.b16 %v586, %v585
        %v625 = vpack.c.b16 %v588, %v587
        %v626 = vpack.c.b16 %v590, %v589
        %v627 = vpack.c.b16 %v592, %v591
        %v628 = vpack.c.b16 %v594, %v593
        %v629 = vpack.c.b16 %v596, %v595
        %v630 = vpack.c.b16 %v598, %v597
        %v679 = vunpack.c.l.b16 %v455
        %v680 = vunpack.c.l.b16 %v456
        %v681 = vunpack.c.l.b16 %v457
        %v682 = vunpack.c.l.b16 %v458
        %v683 = vunpack.c.l.b16 %v459
        %v684 = vunpack.c.l.b16 %v460
        %v685 = vunpack.c.l.b16 %v461
        %v686 = vunpack.c.l.b16 %v462
        %v687 = vunpack.c.l.b16 %v463
        %v688 = vunpack.c.l.b16 %v464
        %v689 = vunpack.c.l.b16 %v465
        %v690 = vunpack.c.l.b16 %v466
        %v691 = vunpack.c.l.b16 %v467
        %v692 = vunpack.c.l.b16 %v468
        %v693 = vunpack.c.l.b16 %v469
        %v694 = vunpack.c.l.b16 %v470
        %v695 = vpack.c.b16 %v680, %v679
        %v696 = vpack.c.b16 %v682, %v681
        %v697 = vpack.c.b16 %v684, %v683
        %v698 = vpack.c.b16 %v686, %v685
        %v699 = vpack.c.b16 %v688, %v687
        %v700 = vpack.c.b16 %v690, %v689
        %v701 = vpack.c.b16 %v692, %v691
        %v702 = vpack.c.b16 %v694, %v693
        %711 = vmatpush.bf16.msra.mxu0 %v702
        %712 = vmatpush.bf16.msra.mxu0 %v701
        %713 = vmatpush.bf16.msra.mxu0 %v700
        %714 = vmatpush.bf16.msra.mxu0 %v699
        %715 = vmatpush.bf16.msra.mxu0 %v698
        %716 = vmatpush.bf16.msra.mxu0 %v697
        %717 = vmatpush.bf16.msra.mxu0 %v696
        %718 = vmatpush.bf16.msra.mxu0 %v695
        %719 = vmatmul.bf16.gmra.mxu0 %v599
        %v720 = vpop.f32.mrf.mxu0
        %v721 = vadd.f32 0.0, %v720
        %v722 = vpop.f32.mrf.mxu0
        %v723 = vadd.f32 0.0, %v722
        %724 = vmatmul.bf16.gmra.mxu0 %v600
        %v725 = vpop.f32.mrf.mxu0
        %v726 = vadd.f32 0.0, %v725
        %v727 = vpop.f32.mrf.mxu0
        %v728 = vadd.f32 0.0, %v727
        %729 = vmatmul.bf16.gmra.mxu0 %v601
        %v730 = vpop.f32.mrf.mxu0
        %v731 = vadd.f32 0.0, %v730
        %v732 = vpop.f32.mrf.mxu0
        %v733 = vadd.f32 0.0, %v732
        %734 = vmatmul.bf16.gmra.mxu0 %v602
        %v735 = vpop.f32.mrf.mxu0
        %v736 = vadd.f32 0.0, %v735
        %v737 = vpop.f32.mrf.mxu0
        %v738 = vadd.f32 0.0, %v737
        %739 = vmatmul.bf16.gmra.mxu0 %v603
        %v740 = vpop.f32.mrf.mxu0
        %v741 = vadd.f32 0.0, %v740
        %v742 = vpop.f32.mrf.mxu0
        %v743 = vadd.f32 0.0, %v742
        %744 = vmatmul.bf16.gmra.mxu0 %v604
        %v745 = vpop.f32.mrf.mxu0
        %v746 = vadd.f32 0.0, %v745
        %v747 = vpop.f32.mrf.mxu0
        %v748 = vadd.f32 0.0, %v747
        %749 = vmatmul.bf16.gmra.mxu0 %v605
        %v750 = vpop.f32.mrf.mxu0
        %v751 = vadd.f32 0.0, %v750
        %v752 = vpop.f32.mrf.mxu0
        %v753 = vadd.f32 0.0, %v752
        %754 = vmatmul.bf16.gmra.mxu0 %v606
        %v755 = vpop.f32.mrf.mxu0
        %v756 = vadd.f32 0.0, %v755
        %v757 = vpop.f32.mrf.mxu0
        %v758 = vadd.f32 0.0, %v757
        %759 = vmatmul.bf16.gmra.mxu0 %v607
        %v760 = vpop.f32.mrf.mxu0
        %v761 = vadd.f32 0.0, %v760
        %v762 = vpop.f32.mrf.mxu0
        %v763 = vadd.f32 0.0, %v762
        %764 = vmatmul.bf16.gmra.mxu0 %v608
        %v765 = vpop.f32.mrf.mxu0
        %v766 = vadd.f32 0.0, %v765
        %v767 = vpop.f32.mrf.mxu0
        %v768 = vadd.f32 0.0, %v767
        %769 = vmatmul.bf16.gmra.mxu0 %v609
        %v770 = vpop.f32.mrf.mxu0
        %v771 = vadd.f32 0.0, %v770
        %v772 = vpop.f32.mrf.mxu0
        %v773 = vadd.f32 0.0, %v772
        %774 = vmatmul.bf16.gmra.mxu0 %v610
        %v775 = vpop.f32.mrf.mxu0
        %v776 = vadd.f32 0.0, %v775
        %v777 = vpop.f32.mrf.mxu0
        %v778 = vadd.f32 0.0, %v777
        %779 = vmatmul.bf16.gmra.mxu0 %v611
        %v780 = vpop.f32.mrf.mxu0
        %v781 = vadd.f32 0.0, %v780
        %v782 = vpop.f32.mrf.mxu0
        %v783 = vadd.f32 0.0, %v782
        %784 = vmatmul.bf16.gmra.mxu0 %v612
        %v785 = vpop.f32.mrf.mxu0
        %v786 = vadd.f32 0.0, %v785
        %v787 = vpop.f32.mrf.mxu0
        %v788 = vadd.f32 0.0, %v787
        %789 = vmatmul.bf16.gmra.mxu0 %v613
        %v790 = vpop.f32.mrf.mxu0
        %v791 = vadd.f32 0.0, %v790
        %v792 = vpop.f32.mrf.mxu0
        %v793 = vadd.f32 0.0, %v792
        %794 = vmatmul.bf16.gmra.mxu0 %v614
        %v795 = vpop.f32.mrf.mxu0
        %v796 = vadd.f32 0.0, %v795
        %v797 = vpop.f32.mrf.mxu0
        %v798 = vadd.f32 0.0, %v797
        %799 = vmatmul.bf16.gmra.mxu0 %v615
        %v800 = vpop.f32.mrf.mxu0
        %v801 = vadd.f32 0.0, %v800
        %v802 = vpop.f32.mrf.mxu0
        %v803 = vadd.f32 0.0, %v802
        %804 = vmatmul.bf16.gmra.mxu0 %v616
        %v805 = vpop.f32.mrf.mxu0
        %v806 = vadd.f32 0.0, %v805
        %v807 = vpop.f32.mrf.mxu0
        %v808 = vadd.f32 0.0, %v807
        %809 = vmatmul.bf16.gmra.mxu0 %v617
        %v810 = vpop.f32.mrf.mxu0
        %v811 = vadd.f32 0.0, %v810
        %v812 = vpop.f32.mrf.mxu0
        %v813 = vadd.f32 0.0, %v812
        %814 = vmatmul.bf16.gmra.mxu0 %v618
        %v815 = vpop.f32.mrf.mxu0
        %v816 = vadd.f32 0.0, %v815
        %v817 = vpop.f32.mrf.mxu0
        %v818 = vadd.f32 0.0, %v817
        %819 = vmatmul.bf16.gmra.mxu0 %v619
        %v820 = vpop.f32.mrf.mxu0
        %v821 = vadd.f32 0.0, %v820
        %v822 = vpop.f32.mrf.mxu0
        %v823 = vadd.f32 0.0, %v822
        %824 = vmatmul.bf16.gmra.mxu0 %v620
        %v825 = vpop.f32.mrf.mxu0
        %v826 = vadd.f32 0.0, %v825
        %v827 = vpop.f32.mrf.mxu0
        %v828 = vadd.f32 0.0, %v827
        %829 = vmatmul.bf16.gmra.mxu0 %v621
        %v830 = vpop.f32.mrf.mxu0
        %v831 = vadd.f32 0.0, %v830
        %v832 = vpop.f32.mrf.mxu0
        %v833 = vadd.f32 0.0, %v832
        %834 = vmatmul.bf16.gmra.mxu0 %v622
        %v835 = vpop.f32.mrf.mxu0
        %v836 = vadd.f32 0.0, %v835
        %v837 = vpop.f32.mrf.mxu0
        %v838 = vadd.f32 0.0, %v837
        %839 = vmatmul.bf16.gmra.mxu0 %v623
        %v840 = vpop.f32.mrf.mxu0
        %v841 = vadd.f32 0.0, %v840
        %v842 = vpop.f32.mrf.mxu0
        %v843 = vadd.f32 0.0, %v842
        %844 = vmatmul.bf16.gmra.mxu0 %v624
        %v845 = vpop.f32.mrf.mxu0
        %v846 = vadd.f32 0.0, %v845
        %v847 = vpop.f32.mrf.mxu0
        %v848 = vadd.f32 0.0, %v847
        %849 = vmatmul.bf16.gmra.mxu0 %v625
        %v850 = vpop.f32.mrf.mxu0
        %v851 = vadd.f32 0.0, %v850
        %v852 = vpop.f32.mrf.mxu0
        %v853 = vadd.f32 0.0, %v852
        %854 = vmatmul.bf16.gmra.mxu0 %v626
        %v855 = vpop.f32.mrf.mxu0
        %v856 = vadd.f32 0.0, %v855
        %v857 = vpop.f32.mrf.mxu0
        %v858 = vadd.f32 0.0, %v857
        %859 = vmatmul.bf16.gmra.mxu0 %v627
        %v860 = vpop.f32.mrf.mxu0
        %v861 = vadd.f32 0.0, %v860
        %v862 = vpop.f32.mrf.mxu0
        %v863 = vadd.f32 0.0, %v862
        %864 = vmatmul.bf16.gmra.mxu0 %v628
        %v865 = vpop.f32.mrf.mxu0
        %v866 = vadd.f32 0.0, %v865
        %v867 = vpop.f32.mrf.mxu0
        %v868 = vadd.f32 0.0, %v867
        %869 = vmatmul.bf16.gmra.mxu0 %v629
        %v870 = vpop.f32.mrf.mxu0
        %v871 = vadd.f32 0.0, %v870
        %v872 = vpop.f32.mrf.mxu0
        %v873 = vadd.f32 0.0, %v872
        %874 = vmatmul.bf16.gmra.mxu0 %v630
        %v875 = vpop.f32.mrf.mxu0
        %v876 = vadd.f32 0.0, %v875
        %v877 = vpop.f32.mrf.mxu0
        %v878 = vadd.f32 0.0, %v877
        %879 = vdwg.mxu0
        %v880 = vadd.f32 %v327, %v721
        %v881 = vadd.f32 %v328, %v723
        %v882 = vadd.f32 %v329, %v726
        %v883 = vadd.f32 %v330, %v728
        %v884 = vadd.f32 %v331, %v731
        %v885 = vadd.f32 %v332, %v733
        %v886 = vadd.f32 %v333, %v736
        %v887 = vadd.f32 %v334, %v738
        %v888 = vadd.f32 %v335, %v741
        %v889 = vadd.f32 %v336, %v743
        %v890 = vadd.f32 %v337, %v746
        %v891 = vadd.f32 %v338, %v748
        %v892 = vadd.f32 %v339, %v751
        %v893 = vadd.f32 %v340, %v753
        %v894 = vadd.f32 %v341, %v756
        %v895 = vadd.f32 %v342, %v758
        %v896 = vadd.f32 %v343, %v761
        %v897 = vadd.f32 %v344, %v763
        %v898 = vadd.f32 %v345, %v766
        %v899 = vadd.f32 %v346, %v768
        %v900 = vadd.f32 %v347, %v771
        %v901 = vadd.f32 %v348, %v773
        %v902 = vadd.f32 %v349, %v776
        %v903 = vadd.f32 %v350, %v778
        %v904 = vadd.f32 %v351, %v781
        %v905 = vadd.f32 %v352, %v783
        %v906 = vadd.f32 %v353, %v786
        %v907 = vadd.f32 %v354, %v788
        %v908 = vadd.f32 %v355, %v791
        %v909 = vadd.f32 %v356, %v793
        %v910 = vadd.f32 %v357, %v796
        %v911 = vadd.f32 %v358, %v798
        %v912 = vadd.f32 %v359, %v801
        %v913 = vadd.f32 %v360, %v803
        %v914 = vadd.f32 %v361, %v806
        %v915 = vadd.f32 %v362, %v808
        %v916 = vadd.f32 %v363, %v811
        %v917 = vadd.f32 %v364, %v813
        %v918 = vadd.f32 %v365, %v816
        %v919 = vadd.f32 %v366, %v818
        %v920 = vadd.f32 %v367, %v821
        %v921 = vadd.f32 %v368, %v823
        %v922 = vadd.f32 %v369, %v826
        %v923 = vadd.f32 %v370, %v828
        %v924 = vadd.f32 %v371, %v831
        %v925 = vadd.f32 %v372, %v833
        %v926 = vadd.f32 %v373, %v836
        %v927 = vadd.f32 %v374, %v838
        %v928 = vadd.f32 %v375, %v841
        %v929 = vadd.f32 %v376, %v843
        %v930 = vadd.f32 %v377, %v846
        %v931 = vadd.f32 %v378, %v848
        %v932 = vadd.f32 %v379, %v851
        %v933 = vadd.f32 %v380, %v853
        %v934 = vadd.f32 %v381, %v856
        %v935 = vadd.f32 %v382, %v858
        %v936 = vadd.f32 %v383, %v861
        %v937 = vadd.f32 %v384, %v863
        %v938 = vadd.f32 %v385, %v866
        %v939 = vadd.f32 %v386, %v868
        %v940 = vadd.f32 %v387, %v871
        %v941 = vadd.f32 %v388, %v873
        %v942 = vadd.f32 %v389, %v876
        %v943 = vadd.f32 %v390, %v878
        %944 = vst [vmem:[#allocation2] sm:$0xff] %v880
        %945 = vst [vmem:[#allocation2 + $0x8] sm:$0xff] %v881
        %946 = vst [vmem:[#allocation2 + $0x10] sm:$0xff] %v882
        %947 = vst [vmem:[#allocation2 + $0x18] sm:$0xff] %v883
        %948 = vst [vmem:[#allocation2 + $0x20] sm:$0xff] %v884
        %949 = vst [vmem:[#allocation2 + $0x28] sm:$0xff] %v885
        %950 = vst [vmem:[#allocation2 + $0x30] sm:$0xff] %v886
        %951 = vst [vmem:[#allocation2 + $0x38] sm:$0xff] %v887
        %952 = vst [vmem:[#allocation2 + $0x40] sm:$0xff] %v888
        %953 = vst [vmem:[#allocation2 + $0x48] sm:$0xff] %v889
        %954 = vst [vmem:[#allocation2 + $0x50] sm:$0xff] %v890
        %955 = vst [vmem:[#allocation2 + $0x58] sm:$0xff] %v891
        %956 = vst [vmem:[#allocation2 + $0x60] sm:$0xff] %v892
        %957 = vst [vmem:[#allocation2 + $0x68] sm:$0xff] %v893
        %958 = vst [vmem:[#allocation2 + $0x70] sm:$0xff] %v894
        %959 = vst [vmem:[#allocation2 + $0x78] sm:$0xff] %v895
        %960 = vst [vmem:[#allocation2 + $0x80] sm:$0xff] %v896
        %961 = vst [vmem:[#allocation2 + $0x88] sm:$0xff] %v897
        %962 = vst [vmem:[#allocation2 + $0x90] sm:$0xff] %v898
        %963 = vst [vmem:[#allocation2 + $0x98] sm:$0xff] %v899
        %964 = vst [vmem:[#allocation2 + $0xa0] sm:$0xff] %v900
        %965 = vst [vmem:[#allocation2 + $0xa8] sm:$0xff] %v901
        %966 = vst [vmem:[#allocation2 + $0xb0] sm:$0xff] %v902
        %967 = vst [vmem:[#allocation2 + $0xb8] sm:$0xff] %v903
        %968 = vst [vmem:[#allocation2 + $0xc0] sm:$0xff] %v904
        %969 = vst [vmem:[#allocation2 + $0xc8] sm:$0xff] %v905
        %970 = vst [vmem:[#allocation2 + $0xd0] sm:$0xff] %v906
        %971 = vst [vmem:[#allocation2 + $0xd8] sm:$0xff] %v907
        %972 = vst [vmem:[#allocation2 + $0xe0] sm:$0xff] %v908
        %973 = vst [vmem:[#allocation2 + $0xe8] sm:$0xff] %v909
        %974 = vst [vmem:[#allocation2 + $0xf0] sm:$0xff] %v910
        %975 = vst [vmem:[#allocation2 + $0xf8] sm:$0xff] %v911
        %976 = vst [vmem:[#allocation2 + $0x100] sm:$0xff] %v912
        %977 = vst [vmem:[#allocation2 + $0x108] sm:$0xff] %v913
        %978 = vst [vmem:[#allocation2 + $0x110] sm:$0xff] %v914
        %979 = vst [vmem:[#allocation2 + $0x118] sm:$0xff] %v915
        %980 = vst [vmem:[#allocation2 + $0x120] sm:$0xff] %v916
        %981 = vst [vmem:[#allocation2 + $0x128] sm:$0xff] %v917
        %982 = vst [vmem:[#allocation2 + $0x130] sm:$0xff] %v918
        %983 = vst [vmem:[#allocation2 + $0x138] sm:$0xff] %v919
        %984 = vst [vmem:[#allocation2 + $0x140] sm:$0xff] %v920
        %985 = vst [vmem:[#allocation2 + $0x148] sm:$0xff] %v921
        %986 = vst [vmem:[#allocation2 + $0x150] sm:$0xff] %v922
        %987 = vst [vmem:[#allocation2 + $0x158] sm:$0xff] %v923
        %988 = vst [vmem:[#allocation2 + $0x160] sm:$0xff] %v924
        %989 = vst [vmem:[#allocation2 + $0x168] sm:$0xff] %v925
        %990 = vst [vmem:[#allocation2 + $0x170] sm:$0xff] %v926
        %991 = vst [vmem:[#allocation2 + $0x178] sm:$0xff] %v927
        %992 = vst [vmem:[#allocation2 + $0x180] sm:$0xff] %v928
        %993 = vst [vmem:[#allocation2 + $0x188] sm:$0xff] %v929
        %994 = vst [vmem:[#allocation2 + $0x190] sm:$0xff] %v930
        %995 = vst [vmem:[#allocation2 + $0x198] sm:$0xff] %v931
        %996 = vst [vmem:[#allocation2 + $0x1a0] sm:$0xff] %v932
        %997 = vst [vmem:[#allocation2 + $0x1a8] sm:$0xff] %v933
        %998 = vst [vmem:[#allocation2 + $0x1b0] sm:$0xff] %v934
        %999 = vst [vmem:[#allocation2 + $0x1b8] sm:$0xff] %v935
        %1000 = vst [vmem:[#allocation2 + $0x1c0] sm:$0xff] %v936
        %1001 = vst [vmem:[#allocation2 + $0x1c8] sm:$0xff] %v937
        %1002 = vst [vmem:[#allocation2 + $0x1d0] sm:$0xff] %v938
        %1003 = vst [vmem:[#allocation2 + $0x1d8] sm:$0xff] %v939
        %1004 = vst [vmem:[#allocation2 + $0x1e0] sm:$0xff] %v940
        %1005 = vst [vmem:[#allocation2 + $0x1e8] sm:$0xff] %v941
        %1006 = vst [vmem:[#allocation2 + $0x1f0] sm:$0xff] %v942
        %1007 = vst [vmem:[#allocation2 + $0x1f8] sm:$0xff] %v943
        // Predicated region
        $region41: #{tpu_custom_call.1} parent=27 // pred_check
          %p1008 = pneg %p259
        $region42: #{tpu_custom_call.1} parent=27 // pred_check_branch
          %1010 = sbr.rel (%p1008) target = $region44
        $region43: #{tpu_custom_call.1} parent=27 // pred_region
          %v1011 = vld [vmem:[#allocation2] sm:$0xff]
          %v1012 = vld [vmem:[#allocation2 + $0x8] sm:$0xff]
          %v1013 = vld [vmem:[#allocation2 + $0x10] sm:$0xff]
          %v1014 = vld [vmem:[#allocation2 + $0x18] sm:$0xff]
          %v1015 = vld [vmem:[#allocation2 + $0x20] sm:$0xff]
          %v1016 = vld [vmem:[#allocation2 + $0x28] sm:$0xff]
          %v1017 = vld [vmem:[#allocation2 + $0x30] sm:$0xff]
          %v1018 = vld [vmem:[#allocation2 + $0x38] sm:$0xff]
          %v1019 = vld [vmem:[#allocation2 + $0x40] sm:$0xff]
          %v1020 = vld [vmem:[#allocation2 + $0x48] sm:$0xff]
          %v1021 = vld [vmem:[#allocation2 + $0x50] sm:$0xff]
          %v1022 = vld [vmem:[#allocation2 + $0x58] sm:$0xff]
          %v1023 = vld [vmem:[#allocation2 + $0x60] sm:$0xff]
          %v1024 = vld [vmem:[#allocation2 + $0x68] sm:$0xff]
          %v1025 = vld [vmem:[#allocation2 + $0x70] sm:$0xff]
          %v1026 = vld [vmem:[#allocation2 + $0x78] sm:$0xff]
          %v1027 = vld [vmem:[#allocation2 + $0x80] sm:$0xff]
          %v1028 = vld [vmem:[#allocation2 + $0x88] sm:$0xff]
          %v1029 = vld [vmem:[#allocation2 + $0x90] sm:$0xff]
          %v1030 = vld [vmem:[#allocation2 + $0x98] sm:$0xff]
          %v1031 = vld [vmem:[#allocation2 + $0xa0] sm:$0xff]
          %v1032 = vld [vmem:[#allocation2 + $0xa8] sm:$0xff]
          %v1033 = vld [vmem:[#allocation2 + $0xb0] sm:$0xff]
          %v1034 = vld [vmem:[#allocation2 + $0xb8] sm:$0xff]
          %v1035 = vld [vmem:[#allocation2 + $0xc0] sm:$0xff]
          %v1036 = vld [vmem:[#allocation2 + $0xc8] sm:$0xff]
          %v1037 = vld [vmem:[#allocation2 + $0xd0] sm:$0xff]
          %v1038 = vld [vmem:[#allocation2 + $0xd8] sm:$0xff]
          %v1039 = vld [vmem:[#allocation2 + $0xe0] sm:$0xff]
          %v1040 = vld [vmem:[#allocation2 + $0xe8] sm:$0xff]
          %v1041 = vld [vmem:[#allocation2 + $0xf0] sm:$0xff]
          %v1042 = vld [vmem:[#allocation2 + $0xf8] sm:$0xff]
          %v1043 = vld [vmem:[#allocation2 + $0x100] sm:$0xff]
          %v1044 = vld [vmem:[#allocation2 + $0x108] sm:$0xff]
          %v1045 = vld [vmem:[#allocation2 + $0x110] sm:$0xff]
          %v1046 = vld [vmem:[#allocation2 + $0x118] sm:$0xff]
          %v1047 = vld [vmem:[#allocation2 + $0x120] sm:$0xff]
          %v1048 = vld [vmem:[#allocation2 + $0x128] sm:$0xff]
          %v1049 = vld [vmem:[#allocation2 + $0x130] sm:$0xff]
          %v1050 = vld [vmem:[#allocation2 + $0x138] sm:$0xff]
          %v1051 = vld [vmem:[#allocation2 + $0x140] sm:$0xff]
          %v1052 = vld [vmem:[#allocation2 + $0x148] sm:$0xff]
          %v1053 = vld [vmem:[#allocation2 + $0x150] sm:$0xff]
          %v1054 = vld [vmem:[#allocation2 + $0x158] sm:$0xff]
          %v1055 = vld [vmem:[#allocation2 + $0x160] sm:$0xff]
          %v1056 = vld [vmem:[#allocation2 + $0x168] sm:$0xff]
          %v1057 = vld [vmem:[#allocation2 + $0x170] sm:$0xff]
          %v1058 = vld [vmem:[#allocation2 + $0x178] sm:$0xff]
          %v1059 = vld [vmem:[#allocation2 + $0x180] sm:$0xff]
          %v1060 = vld [vmem:[#allocation2 + $0x188] sm:$0xff]
          %v1061 = vld [vmem:[#allocation2 + $0x190] sm:$0xff]
          %v1062 = vld [vmem:[#allocation2 + $0x198] sm:$0xff]
          %v1063 = vld [vmem:[#allocation2 + $0x1a0] sm:$0xff]
          %v1064 = vld [vmem:[#allocation2 + $0x1a8] sm:$0xff]
          %v1065 = vld [vmem:[#allocation2 + $0x1b0] sm:$0xff]
          %v1066 = vld [vmem:[#allocation2 + $0x1b8] sm:$0xff]
          %v1067 = vld [vmem:[#allocation2 + $0x1c0] sm:$0xff]
          %v1068 = vld [vmem:[#allocation2 + $0x1c8] sm:$0xff]
          %v1069 = vld [vmem:[#allocation2 + $0x1d0] sm:$0xff]
          %v1070 = vld [vmem:[#allocation2 + $0x1d8] sm:$0xff]
          %v1071 = vld [vmem:[#allocation2 + $0x1e0] sm:$0xff]
          %v1072 = vld [vmem:[#allocation2 + $0x1e8] sm:$0xff]
          %v1073 = vld [vmem:[#allocation2 + $0x1f0] sm:$0xff]
          %v1074 = vld [vmem:[#allocation2 + $0x1f8] sm:$0xff]
          %v1075 = vadd.f32 %v1011, %v1012
          %v1076 = vadd.f32 %v1075, %v1013
          %v1077 = vadd.f32 %v1076, %v1014
          %v1078 = vadd.f32 %v1077, %v1015
          %v1079 = vadd.f32 %v1078, %v1016
          %v1080 = vadd.f32 %v1079, %v1017
          %v1081 = vadd.f32 %v1080, %v1018
          %v1082 = vadd.f32 %v1081, %v1019
          %v1083 = vadd.f32 %v1082, %v1020
          %v1084 = vadd.f32 %v1083, %v1021
          %v1085 = vadd.f32 %v1084, %v1022
          %v1086 = vadd.f32 %v1085, %v1023
          %v1087 = vadd.f32 %v1086, %v1024
          %v1088 = vadd.f32 %v1087, %v1025
          %v1089 = vadd.f32 %v1088, %v1026
          %v1090 = vadd.f32 %v1089, %v1027
          %v1091 = vadd.f32 %v1090, %v1028
          %v1092 = vadd.f32 %v1091, %v1029
          %v1093 = vadd.f32 %v1092, %v1030
          %v1094 = vadd.f32 %v1093, %v1031
          %v1095 = vadd.f32 %v1094, %v1032
          %v1096 = vadd.f32 %v1095, %v1033
          %v1097 = vadd.f32 %v1096, %v1034
          %v1098 = vadd.f32 %v1097, %v1035
          %v1099 = vadd.f32 %v1098, %v1036
          %v1100 = vadd.f32 %v1099, %v1037
          %v1101 = vadd.f32 %v1100, %v1038
          %v1102 = vadd.f32 %v1101, %v1039
          %v1103 = vadd.f32 %v1102, %v1040
          %v1104 = vadd.f32 %v1103, %v1041
          %v1105 = vadd.f32 %v1104, %v1042
          %v1106 = vadd.f32 %v1105, %v1043
          %v1107 = vadd.f32 %v1106, %v1044
          %v1108 = vadd.f32 %v1107, %v1045
          %v1109 = vadd.f32 %v1108, %v1046
          %v1110 = vadd.f32 %v1109, %v1047
          %v1111 = vadd.f32 %v1110, %v1048
          %v1112 = vadd.f32 %v1111, %v1049
          %v1113 = vadd.f32 %v1112, %v1050
          %v1114 = vadd.f32 %v1113, %v1051
          %v1115 = vadd.f32 %v1114, %v1052
          %v1116 = vadd.f32 %v1115, %v1053
          %v1117 = vadd.f32 %v1116, %v1054
          %v1118 = vadd.f32 %v1117, %v1055
          %v1119 = vadd.f32 %v1118, %v1056
          %v1120 = vadd.f32 %v1119, %v1057
          %v1121 = vadd.f32 %v1120, %v1058
          %v1122 = vadd.f32 %v1121, %v1059
          %v1123 = vadd.f32 %v1122, %v1060
          %v1124 = vadd.f32 %v1123, %v1061
          %v1125 = vadd.f32 %v1124, %v1062
          %v1126 = vadd.f32 %v1125, %v1063
          %v1127 = vadd.f32 %v1126, %v1064
          %v1128 = vadd.f32 %v1127, %v1065
          %v1129 = vadd.f32 %v1128, %v1066
          %v1130 = vadd.f32 %v1129, %v1067
          %v1131 = vadd.f32 %v1130, %v1068
          %v1132 = vadd.f32 %v1131, %v1069
          %v1133 = vadd.f32 %v1132, %v1070
          %v1134 = vadd.f32 %v1133, %v1071
          %v1135 = vadd.f32 %v1134, %v1072
          %v1136 = vadd.f32 %v1135, %v1073
          %v1137 = vadd.f32 %v1136, %v1074
          %v1138 = vrot.slane %v1137, 4
          %v1139 = vadd.f32 %v1137, %v1138
          %v1140 = vrot.slane %v1139, 2
          %v1141 = vadd.f32 %v1139, %v1140
          %v1142 = vrot.slane %v1141, 1
          %v1143 = vadd.f32 %v1141, %v1142
          %v1144 = vmul.f32 %v1011, %v1011
          %v1145 = vmul.f32 %v1012, %v1012
          %v1146 = vmul.f32 %v1013, %v1013
          %v1147 = vmul.f32 %v1014, %v1014
          %v1148 = vmul.f32 %v1015, %v1015
          %v1149 = vmul.f32 %v1016, %v1016
          %v1150 = vmul.f32 %v1017, %v1017
          %v1151 = vmul.f32 %v1018, %v1018
          %v1152 = vmul.f32 %v1019, %v1019
          %v1153 = vmul.f32 %v1020, %v1020
          %v1154 = vmul.f32 %v1021, %v1021
          %v1155 = vmul.f32 %v1022, %v1022
          %v1156 = vmul.f32 %v1023, %v1023
          %v1157 = vmul.f32 %v1024, %v1024
          %v1158 = vmul.f32 %v1025, %v1025
          %v1159 = vmul.f32 %v1026, %v1026
          %v1160 = vmul.f32 %v1027, %v1027
          %v1161 = vmul.f32 %v1028, %v1028
          %v1162 = vmul.f32 %v1029, %v1029
          %v1163 = vmul.f32 %v1030, %v1030
          %v1164 = vmul.f32 %v1031, %v1031
          %v1165 = vmul.f32 %v1032, %v1032
          %v1166 = vmul.f32 %v1033, %v1033
          %v1167 = vmul.f32 %v1034, %v1034
          %v1168 = vmul.f32 %v1035, %v1035
          %v1169 = vmul.f32 %v1036, %v1036
          %v1170 = vmul.f32 %v1037, %v1037
          %v1171 = vmul.f32 %v1038, %v1038
          %v1172 = vmul.f32 %v1039, %v1039
          %v1173 = vmul.f32 %v1040, %v1040
          %v1174 = vmul.f32 %v1041, %v1041
          %v1175 = vmul.f32 %v1042, %v1042
          %v1176 = vmul.f32 %v1043, %v1043
          %v1177 = vmul.f32 %v1044, %v1044
          %v1178 = vmul.f32 %v1045, %v1045
          %v1179 = vmul.f32 %v1046, %v1046
          %v1180 = vmul.f32 %v1047, %v1047
          %v1181 = vmul.f32 %v1048, %v1048
          %v1182 = vmul.f32 %v1049, %v1049
          %v1183 = vmul.f32 %v1050, %v1050
          %v1184 = vmul.f32 %v1051, %v1051
          %v1185 = vmul.f32 %v1052, %v1052
          %v1186 = vmul.f32 %v1053, %v1053
          %v1187 = vmul.f32 %v1054, %v1054
          %v1188 = vmul.f32 %v1055, %v1055
          %v1189 = vmul.f32 %v1056, %v1056
          %v1190 = vmul.f32 %v1057, %v1057
          %v1191 = vmul.f32 %v1058, %v1058
          %v1192 = vmul.f32 %v1059, %v1059
          %v1193 = vmul.f32 %v1060, %v1060
          %v1194 = vmul.f32 %v1061, %v1061
          %v1195 = vmul.f32 %v1062, %v1062
          %v1196 = vmul.f32 %v1063, %v1063
          %v1197 = vmul.f32 %v1064, %v1064
          %v1198 = vmul.f32 %v1065, %v1065
          %v1199 = vmul.f32 %v1066, %v1066
          %v1200 = vmul.f32 %v1067, %v1067
          %v1201 = vmul.f32 %v1068, %v1068
          %v1202 = vmul.f32 %v1069, %v1069
          %v1203 = vmul.f32 %v1070, %v1070
          %v1204 = vmul.f32 %v1071, %v1071
          %v1205 = vmul.f32 %v1072, %v1072
          %v1206 = vmul.f32 %v1073, %v1073
          %v1207 = vmul.f32 %v1074, %v1074
          %v1208 = vadd.f32 %v1144, %v1145
          %v1209 = vadd.f32 %v1208, %v1146
          %v1210 = vadd.f32 %v1209, %v1147
          %v1211 = vadd.f32 %v1210, %v1148
          %v1212 = vadd.f32 %v1211, %v1149
          %v1213 = vadd.f32 %v1212, %v1150
          %v1214 = vadd.f32 %v1213, %v1151
          %v1215 = vadd.f32 %v1214, %v1152
          %v1216 = vadd.f32 %v1215, %v1153
          %v1217 = vadd.f32 %v1216, %v1154
          %v1218 = vadd.f32 %v1217, %v1155
          %v1219 = vadd.f32 %v1218, %v1156
          %v1220 = vadd.f32 %v1219, %v1157
          %v1221 = vadd.f32 %v1220, %v1158
          %v1222 = vadd.f32 %v1221, %v1159
          %v1223 = vadd.f32 %v1222, %v1160
          %v1224 = vadd.f32 %v1223, %v1161
          %v1225 = vadd.f32 %v1224, %v1162
          %v1226 = vadd.f32 %v1225, %v1163
          %v1227 = vadd.f32 %v1226, %v1164
          %v1228 = vadd.f32 %v1227, %v1165
          %v1229 = vadd.f32 %v1228, %v1166
          %v1230 = vadd.f32 %v1229, %v1167
          %v1231 = vadd.f32 %v1230, %v1168
          %v1232 = vadd.f32 %v1231, %v1169
          %v1233 = vadd.f32 %v1232, %v1170
          %v1234 = vadd.f32 %v1233, %v1171
          %v1235 = vadd.f32 %v1234, %v1172
          %v1236 = vadd.f32 %v1235, %v1173
          %v1237 = vadd.f32 %v1236, %v1174
          %v1238 = vadd.f32 %v1237, %v1175
          %v1239 = vadd.f32 %v1238, %v1176
          %v1240 = vadd.f32 %v1239, %v1177
          %v1241 = vadd.f32 %v1240, %v1178
          %v1242 = vadd.f32 %v1241, %v1179
          %v1243 = vadd.f32 %v1242, %v1180
          %v1244 = vadd.f32 %v1243, %v1181
          %v1245 = vadd.f32 %v1244, %v1182
          %v1246 = vadd.f32 %v1245, %v1183
          %v1247 = vadd.f32 %v1246, %v1184
          %v1248 = vadd.f32 %v1247, %v1185
          %v1249 = vadd.f32 %v1248, %v1186
          %v1250 = vadd.f32 %v1249, %v1187
          %v1251 = vadd.f32 %v1250, %v1188
          %v1252 = vadd.f32 %v1251, %v1189
          %v1253 = vadd.f32 %v1252, %v1190
          %v1254 = vadd.f32 %v1253, %v1191
          %v1255 = vadd.f32 %v1254, %v1192
          %v1256 = vadd.f32 %v1255, %v1193
          %v1257 = vadd.f32 %v1256, %v1194
          %v1258 = vadd.f32 %v1257, %v1195
          %v1259 = vadd.f32 %v1258, %v1196
          %v1260 = vadd.f32 %v1259, %v1197
          %v1261 = vadd.f32 %v1260, %v1198
          %v1262 = vadd.f32 %v1261, %v1199
          %v1263 = vadd.f32 %v1262, %v1200
          %v1264 = vadd.f32 %v1263, %v1201
          %v1265 = vadd.f32 %v1264, %v1202
          %v1266 = vadd.f32 %v1265, %v1203
          %v1267 = vadd.f32 %v1266, %v1204
          %v1268 = vadd.f32 %v1267, %v1205
          %v1269 = vadd.f32 %v1268, %v1206
          %v1270 = vadd.f32 %v1269, %v1207
          %v1271 = vrot.slane %v1270, 4
          %v1272 = vadd.f32 %v1270, %v1271
          %v1273 = vrot.slane %v1272, 2
          %v1274 = vadd.f32 %v1272, %v1273
          %v1275 = vrot.slane %v1274, 1
          %v1276 = vadd.f32 %v1274, %v1275
          %vm1277 = vcmask 1040384
          %v1278 = vsel %vm1277, %v1143, %v1276
          %1279 = vst [vmem:[%s255] sm:$0x3] %v1278
          %v1280 = vpack.c.bf16 %v1011, %v1011
          %v1281 = vpack.c.bf16 %v1012, %v1012
          %v1282 = vpack.c.bf16 %v1013, %v1013
          %v1283 = vpack.c.bf16 %v1014, %v1014
          %v1284 = vpack.c.bf16 %v1015, %v1015
          %v1285 = vpack.c.bf16 %v1016, %v1016
          %v1286 = vpack.c.bf16 %v1017, %v1017
          %v1287 = vpack.c.bf16 %v1018, %v1018
          %v1288 = vpack.c.bf16 %v1019, %v1019
          %v1289 = vpack.c.bf16 %v1020, %v1020
          %v1290 = vpack.c.bf16 %v1021, %v1021
          %v1291 = vpack.c.bf16 %v1022, %v1022
          %v1292 = vpack.c.bf16 %v1023, %v1023
          %v1293 = vpack.c.bf16 %v1024, %v1024
          %v1294 = vpack.c.bf16 %v1025, %v1025
          %v1295 = vpack.c.bf16 %v1026, %v1026
          %v1296 = vpack.c.bf16 %v1027, %v1027
          %v1297 = vpack.c.bf16 %v1028, %v1028
          %v1298 = vpack.c.bf16 %v1029, %v1029
          %v1299 = vpack.c.bf16 %v1030, %v1030
          %v1300 = vpack.c.bf16 %v1031, %v1031
          %v1301 = vpack.c.bf16 %v1032, %v1032
          %v1302 = vpack.c.bf16 %v1033, %v1033
          %v1303 = vpack.c.bf16 %v1034, %v1034
          %v1304 = vpack.c.bf16 %v1035, %v1035
          %v1305 = vpack.c.bf16 %v1036, %v1036
          %v1306 = vpack.c.bf16 %v1037, %v1037
          %v1307 = vpack.c.bf16 %v1038, %v1038
          %v1308 = vpack.c.bf16 %v1039, %v1039
          %v1309 = vpack.c.bf16 %v1040, %v1040
          %v1310 = vpack.c.bf16 %v1041, %v1041
          %v1311 = vpack.c.bf16 %v1042, %v1042
          %v1312 = vpack.c.bf16 %v1043, %v1043
          %v1313 = vpack.c.bf16 %v1044, %v1044
          %v1314 = vpack.c.bf16 %v1045, %v1045
          %v1315 = vpack.c.bf16 %v1046, %v1046
          %v1316 = vpack.c.bf16 %v1047, %v1047
          %v1317 = vpack.c.bf16 %v1048, %v1048
          %v1318 = vpack.c.bf16 %v1049, %v1049
          %v1319 = vpack.c.bf16 %v1050, %v1050
          %v1320 = vpack.c.bf16 %v1051, %v1051
          %v1321 = vpack.c.bf16 %v1052, %v1052
          %v1322 = vpack.c.bf16 %v1053, %v1053
          %v1323 = vpack.c.bf16 %v1054, %v1054
          %v1324 = vpack.c.bf16 %v1055, %v1055
          %v1325 = vpack.c.bf16 %v1056, %v1056
          %v1326 = vpack.c.bf16 %v1057, %v1057
          %v1327 = vpack.c.bf16 %v1058, %v1058
          %v1328 = vpack.c.bf16 %v1059, %v1059
          %v1329 = vpack.c.bf16 %v1060, %v1060
          %v1330 = vpack.c.bf16 %v1061, %v1061
          %v1331 = vpack.c.bf16 %v1062, %v1062
          %v1332 = vpack.c.bf16 %v1063, %v1063
          %v1333 = vpack.c.bf16 %v1064, %v1064
          %v1334 = vpack.c.bf16 %v1065, %v1065
          %v1335 = vpack.c.bf16 %v1066, %v1066
          %v1336 = vpack.c.bf16 %v1067, %v1067
          %v1337 = vpack.c.bf16 %v1068, %v1068
          %v1338 = vpack.c.bf16 %v1069, %v1069
          %v1339 = vpack.c.bf16 %v1070, %v1070
          %v1340 = vpack.c.bf16 %v1071, %v1071
          %v1341 = vpack.c.bf16 %v1072, %v1072
          %v1342 = vpack.c.bf16 %v1073, %v1073
          %v1343 = vpack.c.bf16 %v1074, %v1074
          %1344 = vst [vmem:[%s248] sm:$0xf] %v1280
          %1345 = vst [vmem:[%s248 + $0x4] sm:$0xf] %v1281
          %1346 = vst [vmem:[%s248 + $0x8] sm:$0xf] %v1282
          %1347 = vst [vmem:[%s248 + $0xc] sm:$0xf] %v1283
          %1348 = vst [vmem:[%s248 + $0x10] sm:$0xf] %v1284
          %1349 = vst [vmem:[%s248 + $0x14] sm:$0xf] %v1285
          %1350 = vst [vmem:[%s248 + $0x18] sm:$0xf] %v1286
          %1351 = vst [vmem:[%s248 + $0x1c] sm:$0xf] %v1287
          %1352 = vst [vmem:[%s248 + $0x20] sm:$0xf] %v1288
          %1353 = vst [vmem:[%s248 + $0x24] sm:$0xf] %v1289
          %1354 = vst [vmem:[%s248 + $0x28] sm:$0xf] %v1290
          %1355 = vst [vmem:[%s248 + $0x2c] sm:$0xf] %v1291
          %1356 = vst [vmem:[%s248 + $0x30] sm:$0xf] %v1292
          %1357 = vst [vmem:[%s248 + $0x34] sm:$0xf] %v1293
          %1358 = vst [vmem:[%s248 + $0x38] sm:$0xf] %v1294
          %1359 = vst [vmem:[%s248 + $0x3c] sm:$0xf] %v1295
          %1360 = vst [vmem:[%s248 + $0x40] sm:$0xf] %v1296
          %1361 = vst [vmem:[%s248 + $0x44] sm:$0xf] %v1297
          %1362 = vst [vmem:[%s248 + $0x48] sm:$0xf] %v1298
          %1363 = vst [vmem:[%s248 + $0x4c] sm:$0xf] %v1299
          %1364 = vst [vmem:[%s248 + $0x50] sm:$0xf] %v1300
          %1365 = vst [vmem:[%s248 + $0x54] sm:$0xf] %v1301
          %1366 = vst [vmem:[%s248 + $0x58] sm:$0xf] %v1302
          %1367 = vst [vmem:[%s248 + $0x5c] sm:$0xf] %v1303
          %1368 = vst [vmem:[%s248 + $0x60] sm:$0xf] %v1304
          %1369 = vst [vmem:[%s248 + $0x64] sm:$0xf] %v1305
          %1370 = vst [vmem:[%s248 + $0x68] sm:$0xf] %v1306
          %1371 = vst [vmem:[%s248 + $0x6c] sm:$0xf] %v1307
          %1372 = vst [vmem:[%s248 + $0x70] sm:$0xf] %v1308
          %1373 = vst [vmem:[%s248 + $0x74] sm:$0xf] %v1309
          %1374 = vst [vmem:[%s248 + $0x78] sm:$0xf] %v1310
          %1375 = vst [vmem:[%s248 + $0x7c] sm:$0xf] %v1311
          %1376 = vst [vmem:[%s248 + $0x80] sm:$0xf] %v1312
          %1377 = vst [vmem:[%s248 + $0x84] sm:$0xf] %v1313
          %1378 = vst [vmem:[%s248 + $0x88] sm:$0xf] %v1314
          %1379 = vst [vmem:[%s248 + $0x8c] sm:$0xf] %v1315
          %1380 = vst [vmem:[%s248 + $0x90] sm:$0xf] %v1316
          %1381 = vst [vmem:[%s248 + $0x94] sm:$0xf] %v1317
          %1382 = vst [vmem:[%s248 + $0x98] sm:$0xf] %v1318
          %1383 = vst [vmem:[%s248 + $0x9c] sm:$0xf] %v1319
          %1384 = vst [vmem:[%s248 + $0xa0] sm:$0xf] %v1320
          %1385 = vst [vmem:[%s248 + $0xa4] sm:$0xf] %v1321
          %1386 = vst [vmem:[%s248 + $0xa8] sm:$0xf] %v1322
          %1387 = vst [vmem:[%s248 + $0xac] sm:$0xf] %v1323
          %1388 = vst [vmem:[%s248 + $0xb0] sm:$0xf] %v1324
          %1389 = vst [vmem:[%s248 + $0xb4] sm:$0xf] %v1325
          %1390 = vst [vmem:[%s248 + $0xb8] sm:$0xf] %v1326
          %1391 = vst [vmem:[%s248 + $0xbc] sm:$0xf] %v1327
          %1392 = vst [vmem:[%s248 + $0xc0] sm:$0xf] %v1328
          %1393 = vst [vmem:[%s248 + $0xc4] sm:$0xf] %v1329
          %1394 = vst [vmem:[%s248 + $0xc8] sm:$0xf] %v1330
          %1395 = vst [vmem:[%s248 + $0xcc] sm:$0xf] %v1331
          %1396 = vst [vmem:[%s248 + $0xd0] sm:$0xf] %v1332
          %1397 = vst [vmem:[%s248 + $0xd4] sm:$0xf] %v1333
          %1398 = vst [vmem:[%s248 + $0xd8] sm:$0xf] %v1334
          %1399 = vst [vmem:[%s248 + $0xdc] sm:$0xf] %v1335
          %1400 = vst [vmem:[%s248 + $0xe0] sm:$0xf] %v1336
          %1401 = vst [vmem:[%s248 + $0xe4] sm:$0xf] %v1337
          %1402 = vst [vmem:[%s248 + $0xe8] sm:$0xf] %v1338
          %1403 = vst [vmem:[%s248 + $0xec] sm:$0xf] %v1339
          %1404 = vst [vmem:[%s248 + $0xf0] sm:$0xf] %v1340
          %1405 = vst [vmem:[%s248 + $0xf4] sm:$0xf] %v1341
          %1406 = vst [vmem:[%s248 + $0xf8] sm:$0xf] %v1342
          %1407 = vst [vmem:[%s248 + $0xfc] sm:$0xf] %v1343
        $region44: #{tpu_custom_call.1} parent=27 // pred_fallthru
          _
        %s1408 = sand.u32 %s110, 1
        %s1409 = scalar_lea.sflag [#allocation5], %s1408
        %s1410 = sand.u32 %s110, 1
        %s1411 = smul.addr %s1410, 256
        %s1412 = scalar_lea.vmem [#allocation8], %s1411
        %s1413 = sand.u32 %s138, 1
        %s1414 = scalar_lea.sflag [#allocation10], %s1413
        %s1415 = sand.u32 %s138, 1
        %s1416 = smul.addr %s1415, 2
        %s1417 = scalar_lea.vmem [#allocation9], %s1416
        // Predicated region
        $region45: #{tpu_custom_call.1} parent=27 // pred_check
          %p1418 = pneg %p120
        $region46: #{tpu_custom_call.1} parent=27 // pred_check_branch
          %1420 = sbr.rel (%p1418) target = $region48
        $region47: #{tpu_custom_call.1} parent=27 // pred_region
          %s1421 = smul.u32 64, %s30
          %1423 = vsyncadd %s1409, 0
          %s1424 = sadd.s32 %s31, %s1421
          %s1425 = smul.addr %s1424, 4
          %s1426 = scalar_lea.hbm %s2, %s1425
          %s1427 = sshll.u32 %s1412, 4
          %s1428 = int_to_ptr.vmem [resolvable:$true] %s1427
          %s1429 = sshll.u32 %s1426, 4
          %s1430 = int_to_ptr.hbm [resolvable:$true] %s1429
          %1435 = dma.vmem_to_hbm [thread:$0]  %s1428, 4096, %s1430, %s1409, 64, 64, 4
        $region48: #{tpu_custom_call.1} parent=27 // pred_fallthru
          _
        // Predicated region
        $region49: #{tpu_custom_call.1} parent=27 // pred_check
          %p1436 = pneg %p148
        $region50: #{tpu_custom_call.1} parent=27 // pred_check_branch
          %1438 = sbr.rel (%p1436) target = $region52
        $region51: #{tpu_custom_call.1} parent=27 // pred_region
          %1440 = vsyncadd %s1414, 0
          %s1441 = sadd.s32 %s31, %s30
          %s1442 = smul.addr %s1441, 2
          %s1443 = scalar_lea.hbm %s3, %s1442
          %s1445 = sshll.u32 %s1417, 4
          %s1446 = int_to_ptr.vmem [resolvable:$true] %s1445
          %s1447 = sshll.u32 %s1443, 4
          %s1448 = int_to_ptr.hbm [resolvable:$true] %s1447
          %1450 = dma.vmem_to_hbm [thread:$0]  %s1446, 32, %s1448, %s1414
        $region52: #{tpu_custom_call.1} parent=27 // pred_fallthru
          _
      $region28: #{tpu_custom_call.1} parent=5 // pred_fallthru
        _
      %p1451 = scmp.le.s32.totalorder 2, %s20
      // Predicated region
      $region53: #{tpu_custom_call.1} parent=5 // pred_check
        %p1452 = pneg %p1451
      $region54: #{tpu_custom_call.1} parent=5 // pred_check_branch
        %1454 = sbr.rel (%p1452) target = $region56
      $region55: #{tpu_custom_call.1} parent=5 // pred_region
        %s1455 = ssub.s32 %s20, 2
        // Predicated region
        $region57: #{tpu_custom_call.1} parent=55 // pred_check
          %p1456 = pneg %p126
        $region58: #{tpu_custom_call.1} parent=55 // pred_check_branch
          %1458 = sbr.rel (%p1456) target = $region60
        $region59: #{tpu_custom_call.1} parent=55 // pred_region
          %s1459 = sand.u32 %s111, 1
          %s1460 = scalar_lea.sflag [#allocation5], %s1459
          %s1461 = sand.u32 %s111, 1
          %s1462 = smul.addr %s1461, 256
          %s1463 = scalar_lea.vmem [#allocation8], %s1462
          %1465 = dma.done %s1460, 4096
        $region60: #{tpu_custom_call.1} parent=55 // pred_fallthru
          _
        // Predicated region
        $region61: #{tpu_custom_call.1} parent=55 // pred_check
          %p1466 = pneg %p154
        $region62: #{tpu_custom_call.1} parent=55 // pred_check_branch
          %1468 = sbr.rel (%p1466) target = $region64
        $region63: #{tpu_custom_call.1} parent=55 // pred_region
          %s1469 = sand.u32 %s139, 1
          %s1470 = scalar_lea.sflag [#allocation10], %s1469
          %s1471 = sand.u32 %s139, 1
          %s1472 = smul.addr %s1471, 2
          %s1473 = scalar_lea.vmem [#allocation9], %s1472
          %1475 = dma.done %s1470, 32
        $region64: #{tpu_custom_call.1} parent=55 // pred_fallthru
          _
      $region56: #{tpu_custom_call.1} parent=5 // pred_fallthru
        _
    $region6: #{tpu_custom_call.1} parent=1 // loop_footer
      %s24 = sadd.s32 1, %s20
    $region7: #{tpu_custom_call.1} parent=1 // loop_footer_branch
      %19 = sbr.rel target = $region3
    $region8: #{tpu_custom_call.1} parent=1 // loop_exit
      _
    %1476 = vsyncpa [#allocation4], 1
    %s1477 = scalar_lea.sflag [#allocation4], 1
    %1478 = vsyncpa %s1477, 1
    %1479 = vsyncpa [#allocation7], 1
    %1480 = vsyncpa [#allocation5], 1
    %s1481 = scalar_lea.sflag [#allocation5], 1
    %1482 = vsyncpa %s1481, 1
    %1483 = vsyncpa [#allocation10], 1
    %s1484 = scalar_lea.sflag [#allocation10], 1
    %1485 = vsyncpa %s1484, 1

</llo_original>
